<compile_context>
chip_gen: v7x
topology: tpu7x:2x2x1
jax: 0.10.0
libtpu: 0.0.40
codegen_flags: <defaults>
</compile_context>

<pallas_src>
import jax
import jax.numpy as jnp
import numpy as np
from jax.experimental import pallas as pl
from jax.experimental.pallas import tpu as pltpu

HIDDEN = 10     # hidden_size of the module's nn.RNN (kept exactly)
LANES = 128     # lane-dense padded hidden width used inside the kernel


# ---------------------------------------------------------------------------
# Fused kernel: input projection (one big dot) + 2-layer recurrence + softmax.
# Everything lives in VMEM for the whole call (no grid, no pipelining needed).
# ---------------------------------------------------------------------------
def fused_rnn_softmax_kernel(x_ref, wih0t_ref, b0_ref, whh0t_ref,
                             wih1t_ref, whh1t_ref, b1_ref, o_ref):
    B, T, D = x_ref.shape
    Hp = wih0t_ref.shape[1]

    # ---- layer-0 input projection for ALL timesteps in one MXU dot ----------
    # A = x_flat @ W_ih0^T + (b_ih0 + b_hh0)            -> (B*T, Hp)
    x_flat = x_ref[...].reshape(B * T, D)
    a = jnp.dot(x_flat, wih0t_ref[...],
                preferred_element_type=jnp.float32) + b0_ref[...]
    a = a.reshape(B, T, Hp)                             # (B, T, Hp)

    # Hoist weight/bias loads out of the time loop.
    whh0t = whh0t_ref[...]
    wih1t = wih1t_ref[...]
    whh1t = whh1t_ref[...]
    b1 = b1_ref[...]

    h0 = jnp.zeros((B, Hp), jnp.float32)
    h1 = jnp.zeros((B, Hp), jnp.float32)

    # ---- sequential recurrence over time (T static, fully unrolled) ---------
    for t in range(T):
        # layer 0: h0 = tanh(x_t W_ih0^T + b_ih0 + h0 W_hh0^T + b_hh0)
        h0 = jnp.tanh(a[:, t, :]
                      + jnp.dot(h0, whh0t, preferred_element_type=jnp.float32))
        # layer 1: h1 = tanh(h0 W_ih1^T + b_ih1 + h1 W_hh1^T + b_hh1)
        h1 = jnp.tanh(jnp.dot(h0, wih1t, preferred_element_type=jnp.float32)
                      + jnp.dot(h1, whh1t, preferred_element_type=jnp.float32)
                      + b1)
        # nn.Softmax() (dim=None on 3-D input => dim 0 = batch), per (t, h).
        m = jnp.max(h1, axis=0, keepdims=True)
        e = jnp.exp(h1 - m)
        o_ref[:, t, :] = e / jnp.sum(e, axis=0, keepdims=True)


# ---------------------------------------------------------------------------
# Wrapper: pad hidden dim to 128 lanes, run one fused pallas_call, slice back.
# ---------------------------------------------------------------------------
def sentiment_forward(x, params, lanes=LANES):
    (w_ih0, w_hh0, b_ih0, b_hh0, w_ih1, w_hh1, b_ih1, b_hh1) = params
    B, T, D = x.shape
    H = w_ih0.shape[0]
    pad = lanes - H
    assert pad >= 0

    f32 = jnp.float32
    # Zero-padding keeps the padded hidden channels identically zero through
    # the recurrence (tanh(0)=0), so the first H output lanes are exact.
    wih0t = jnp.pad(w_ih0.T.astype(f32), ((0, 0), (0, pad)))       # (D, Hp)
    whh0t = jnp.pad(w_hh0.T.astype(f32), ((0, pad), (0, pad)))     # (Hp, Hp)
    wih1t = jnp.pad(w_ih1.T.astype(f32), ((0, pad), (0, pad)))     # (Hp, Hp)
    whh1t = jnp.pad(w_hh1.T.astype(f32), ((0, pad), (0, pad)))     # (Hp, Hp)
    b0 = jnp.pad((b_ih0 + b_hh0).astype(f32), (0, pad))[None, :]   # (1, Hp)
    b1 = jnp.pad((b_ih1 + b_hh1).astype(f32), (0, pad))[None, :]   # (1, Hp)

    vmem = pl.BlockSpec(memory_space=pltpu.MemorySpace.VMEM)
    out = pl.pallas_call(
        fused_rnn_softmax_kernel,
        out_shape=jax.ShapeDtypeStruct((B, T, lanes), jnp.float32),
        in_specs=[vmem] * 7,
        out_specs=vmem,
    )(x.astype(f32), wih0t, b0, whh0t, wih1t, whh1t, b1)

    return out[..., :H]                                            # (B, T, H)


# Pure-JAX reference of the PyTorch forward (for correctness check).
def sentiment_forward_ref(x, params):
    (w_ih0, w_hh0, b_ih0, b_hh0, w_ih1, w_hh1, b_ih1, b_hh1) = params
    B, T, D = x.shape
    H = w_ih0.shape[0]
    h0 = jnp.zeros((B, H), jnp.float32)
    h1 = jnp.zeros((B, H), jnp.float32)
    outs = []
    for t in range(T):
        h0 = jnp.tanh(x[:, t, :] @ w_ih0.T + b_ih0 + h0 @ w_hh0.T + b_hh0)
        h1 = jnp.tanh(h0 @ w_ih1.T + b_ih1 + h1 @ w_hh1.T + b_hh1)
        outs.append(h1)
    y = jnp.stack(outs, axis=1)           # (B, T, H)
    return jax.nn.softmax(y, axis=0)      # nn.Softmax() => dim 0 on 3-D input


if __name__ == "__main__":
    # Small shapes consistent with the module: original input_size=15186 scaled
    # down to D=256 for the demo; hidden_size=10 and num_layers=2 kept exactly.
    B, T, D, H = 2, 8, 256, HIDDEN

    key = jax.random.PRNGKey(0)
    keys = jax.random.split(key, 9)
    bound = 1.0 / np.sqrt(H)  # PyTorch nn.RNN init: U(-1/sqrt(H), 1/sqrt(H))

    def u(k, shape):
        return jax.random.uniform(k, shape, jnp.float32, -bound, bound)

    params = (
        u(keys[0], (H, D)),   # w_ih_l0
        u(keys[1], (H, H)),   # w_hh_l0
        u(keys[2], (H,)),     # b_ih_l0
        u(keys[3], (H,)),     # b_hh_l0
        u(keys[4], (H, H)),   # w_ih_l1
        u(keys[5], (H, H)),   # w_hh_l1
        u(keys[6], (H,)),     # b_ih_l1
        u(keys[7], (H,)),     # b_hh_l1
    )
    x = jax.random.normal(keys[8], (B, T, D), jnp.float32)

    y = jax.block_until_ready(sentiment_forward(x, params))
    y_ref = jax.block_until_ready(sentiment_forward_ref(x, params))

    assert y.shape == (B, T, H)
    np.testing.assert_allclose(np.asarray(y), np.asarray(y_ref),
                               rtol=1e-5, atol=1e-5)
    print("KERNEL_OK")
</pallas_src>

<mosaic_0001>
module attributes {stable_mosaic.version = 11 : i64} {
  func.func @fused_rnn_softmax_kernel(%arg0: memref<2x8x256xf32, #tpu.memory_space<vmem>>, %arg1: memref<256x128xf32, #tpu.memory_space<vmem>>, %arg2: memref<1x128xf32, #tpu.memory_space<vmem>>, %arg3: memref<128x128xf32, #tpu.memory_space<vmem>>, %arg4: memref<128x128xf32, #tpu.memory_space<vmem>>, %arg5: memref<128x128xf32, #tpu.memory_space<vmem>>, %arg6: memref<1x128xf32, #tpu.memory_space<vmem>>, %arg7: memref<2x8x128xf32, #tpu.memory_space<vmem>>) attributes {dimension_semantics = [], scalar_prefetch = 0 : i64, scratch_operands = 0 : i64, tpu.core_type = #tpu.core_type<tc>} {
    %c0 = arith.constant 0 : index
    %c0_0 = arith.constant 0 : index
    %c0_1 = arith.constant 0 : index
    %0 = vector.load %arg0[%c0, %c0_0, %c0_1] : memref<2x8x256xf32, #tpu.memory_space<vmem>>, vector<2x8x256xf32>
    %1 = vector.shape_cast %0 : vector<2x8x256xf32> to vector<16x256xf32>
    %c0_2 = arith.constant 0 : index
    %c0_3 = arith.constant 0 : index
    %2 = vector.load %arg1[%c0_2, %c0_3] : memref<256x128xf32, #tpu.memory_space<vmem>>, vector<256x128xf32>
    %cst = arith.constant dense<0.000000e+00> : vector<16x128xf32>
    %3 = tpu.matmul %1, %2, %cst {dimension_numbers = #tpu.dot_dimension_numbers<[1], [0], [0], [1], [0, 0, 1, 1], [], []>} : vector<16x256xf32>, vector<256x128xf32>, vector<16x128xf32> -> vector<16x128xf32>
    %c0_4 = arith.constant 0 : index
    %c0_5 = arith.constant 0 : index
    %4 = vector.load %arg2[%c0_4, %c0_5] : memref<1x128xf32, #tpu.memory_space<vmem>>, vector<1x128xf32>
    %5 = vector.broadcast %4 : vector<1x128xf32> to vector<16x128xf32>
    %6 = arith.addf %3, %5 : vector<16x128xf32>
    %7 = vector.shape_cast %6 : vector<16x128xf32> to vector<2x8x128xf32>
    %c0_6 = arith.constant 0 : index
    %c0_7 = arith.constant 0 : index
    %8 = vector.load %arg3[%c0_6, %c0_7] : memref<128x128xf32, #tpu.memory_space<vmem>>, vector<128x128xf32>
    %c0_8 = arith.constant 0 : index
    %c0_9 = arith.constant 0 : index
    %9 = vector.load %arg4[%c0_8, %c0_9] : memref<128x128xf32, #tpu.memory_space<vmem>>, vector<128x128xf32>
    %c0_10 = arith.constant 0 : index
    %c0_11 = arith.constant 0 : index
    %10 = vector.load %arg5[%c0_10, %c0_11] : memref<128x128xf32, #tpu.memory_space<vmem>>, vector<128x128xf32>
    %c0_12 = arith.constant 0 : index
    %c0_13 = arith.constant 0 : index
    %11 = vector.load %arg6[%c0_12, %c0_13] : memref<1x128xf32, #tpu.memory_space<vmem>>, vector<1x128xf32>
    %cst_14 = arith.constant 0.000000e+00 : f32
    %12 = vector.broadcast %cst_14 : f32 to vector<2x128xf32>
    %cst_15 = arith.constant 0.000000e+00 : f32
    %13 = vector.broadcast %cst_15 : f32 to vector<2x128xf32>
    %14 = vector.extract_strided_slice %7 {offsets = [0, 0, 0], sizes = [2, 1, 128], strides = [1, 1, 1]} : vector<2x8x128xf32> to vector<2x1x128xf32>
    %15 = vector.shape_cast %14 : vector<2x1x128xf32> to vector<2x128xf32>
    %cst_16 = arith.constant dense<0.000000e+00> : vector<2x128xf32>
    %16 = tpu.matmul %12, %8, %cst_16 {dimension_numbers = #tpu.dot_dimension_numbers<[1], [0], [0], [1], [0, 0, 1, 1], [], []>} : vector<2x128xf32>, vector<128x128xf32>, vector<2x128xf32> -> vector<2x128xf32>
    %17 = arith.addf %15, %16 : vector<2x128xf32>
    %18 = math.tanh %17 : vector<2x128xf32>
    %cst_17 = arith.constant dense<0.000000e+00> : vector<2x128xf32>
    %19 = tpu.matmul %18, %9, %cst_17 {dimension_numbers = #tpu.dot_dimension_numbers<[1], [0], [0], [1], [0, 0, 1, 1], [], []>} : vector<2x128xf32>, vector<128x128xf32>, vector<2x128xf32> -> vector<2x128xf32>
    %cst_18 = arith.constant dense<0.000000e+00> : vector<2x128xf32>
    %20 = tpu.matmul %13, %10, %cst_18 {dimension_numbers = #tpu.dot_dimension_numbers<[1], [0], [0], [1], [0, 0, 1, 1], [], []>} : vector<2x128xf32>, vector<128x128xf32>, vector<2x128xf32> -> vector<2x128xf32>
    %21 = arith.addf %19, %20 : vector<2x128xf32>
    %22 = vector.broadcast %11 : vector<1x128xf32> to vector<2x128xf32>
    %23 = arith.addf %21, %22 : vector<2x128xf32>
    %24 = math.tanh %23 : vector<2x128xf32>
    %cst_19 = arith.constant dense<0xFF800000> : vector<128xf32>
    %25 = vector.multi_reduction <maximumf>, %24, %cst_19 [0] : vector<2x128xf32> to vector<128xf32>
    %26 = vector.shape_cast %25 : vector<128xf32> to vector<1x128xf32>
    %27 = vector.broadcast %26 : vector<1x128xf32> to vector<2x128xf32>
    %28 = arith.subf %24, %27 : vector<2x128xf32>
    %29 = math.exp %28 : vector<2x128xf32>
    %cst_20 = arith.constant dense<0.000000e+00> : vector<128xf32>
    %30 = vector.multi_reduction <add>, %29, %cst_20 [0] : vector<2x128xf32> to vector<128xf32>
    %31 = vector.shape_cast %30 : vector<128xf32> to vector<1x128xf32>
    %32 = vector.broadcast %31 : vector<1x128xf32> to vector<2x128xf32>
    %33 = arith.divf %29, %32 : vector<2x128xf32>
    %c0_21 = arith.constant 0 : index
    %c0_22 = arith.constant 0 : index
    %c0_23 = arith.constant 0 : index
    %34 = vector.load %arg7[%c0_21, %c0_22, %c0_23] : memref<2x8x128xf32, #tpu.memory_space<vmem>>, vector<2x1x128xf32>
    %35 = vector.shape_cast %34 : vector<2x1x128xf32> to vector<2x128xf32>
    %36 = vector.shape_cast %33 : vector<2x128xf32> to vector<2x1x128xf32>
    tpu.vector_store %arg7[%c0_21, %c0_22, %c0_23], %36 {strides = array<i32>} : memref<2x8x128xf32, #tpu.memory_space<vmem>>, vector<2x1x128xf32>,
    %37 = vector.extract_strided_slice %7 {offsets = [0, 1, 0], sizes = [2, 1, 128], strides = [1, 1, 1]} : vector<2x8x128xf32> to vector<2x1x128xf32>
    %38 = vector.shape_cast %37 : vector<2x1x128xf32> to vector<2x128xf32>
    %cst_24 = arith.constant dense<0.000000e+00> : vector<2x128xf32>
    %39 = tpu.matmul %18, %8, %cst_24 {dimension_numbers = #tpu.dot_dimension_numbers<[1], [0], [0], [1], [0, 0, 1, 1], [], []>} : vector<2x128xf32>, vector<128x128xf32>, vector<2x128xf32> -> vector<2x128xf32>
    %40 = arith.addf %38, %39 : vector<2x128xf32>
    %41 = math.tanh %40 : vector<2x128xf32>
    %cst_25 = arith.constant dense<0.000000e+00> : vector<2x128xf32>
    %42 = tpu.matmul %41, %9, %cst_25 {dimension_numbers = #tpu.dot_dimension_numbers<[1], [0], [0], [1], [0, 0, 1, 1], [], []>} : vector<2x128xf32>, vector<128x128xf32>, vector<2x128xf32> -> vector<2x128xf32>
    %cst_26 = arith.constant dense<0.000000e+00> : vector<2x128xf32>
    %43 = tpu.matmul %24, %10, %cst_26 {dimension_numbers = #tpu.dot_dimension_numbers<[1], [0], [0], [1], [0, 0, 1, 1], [], []>} : vector<2x128xf32>, vector<128x128xf32>, vector<2x128xf32> -> vector<2x128xf32>
    %44 = arith.addf %42, %43 : vector<2x128xf32>
    %45 = vector.broadcast %11 : vector<1x128xf32> to vector<2x128xf32>
    %46 = arith.addf %44, %45 : vector<2x128xf32>
    %47 = math.tanh %46 : vector<2x128xf32>
    %cst_27 = arith.constant dense<0xFF800000> : vector<128xf32>
    %48 = vector.multi_reduction <maximumf>, %47, %cst_27 [0] : vector<2x128xf32> to vector<128xf32>
    %49 = vector.shape_cast %48 : vector<128xf32> to vector<1x128xf32>
    %50 = vector.broadcast %49 : vector<1x128xf32> to vector<2x128xf32>
    %51 = arith.subf %47, %50 : vector<2x128xf32>
    %52 = math.exp %51 : vector<2x128xf32>
    %cst_28 = arith.constant dense<0.000000e+00> : vector<128xf32>
    %53 = vector.multi_reduction <add>, %52, %cst_28 [0] : vector<2x128xf32> to vector<128xf32>
    %54 = vector.shape_cast %53 : vector<128xf32> to vector<1x128xf32>
    %55 = vector.broadcast %54 : vector<1x128xf32> to vector<2x128xf32>
    %56 = arith.divf %52, %55 : vector<2x128xf32>
    %c0_29 = arith.constant 0 : index
    %c1 = arith.constant 1 : index
    %c0_30 = arith.constant 0 : index
    %57 = vector.load %arg7[%c0_29, %c1, %c0_30] : memref<2x8x128xf32, #tpu.memory_space<vmem>>, vector<2x1x128xf32>
    %58 = vector.shape_cast %57 : vector<2x1x128xf32> to vector<2x128xf32>
    %59 = vector.shape_cast %56 : vector<2x128xf32> to vector<2x1x128xf32>
    tpu.vector_store %arg7[%c0_29, %c1, %c0_30], %59 {strides = array<i32>} : memref<2x8x128xf32, #tpu.memory_space<vmem>>, vector<2x1x128xf32>,
    %60 = vector.extract_strided_slice %7 {offsets = [0, 2, 0], sizes = [2, 1, 128], strides = [1, 1, 1]} : vector<2x8x128xf32> to vector<2x1x128xf32>
    %61 = vector.shape_cast %60 : vector<2x1x128xf32> to vector<2x128xf32>
    %cst_31 = arith.constant dense<0.000000e+00> : vector<2x128xf32>
    %62 = tpu.matmul %41, %8, %cst_31 {dimension_numbers = #tpu.dot_dimension_numbers<[1], [0], [0], [1], [0, 0, 1, 1], [], []>} : vector<2x128xf32>, vector<128x128xf32>, vector<2x128xf32> -> vector<2x128xf32>
    %63 = arith.addf %61, %62 : vector<2x128xf32>
    %64 = math.tanh %63 : vector<2x128xf32>
    %cst_32 = arith.constant dense<0.000000e+00> : vector<2x128xf32>
    %65 = tpu.matmul %64, %9, %cst_32 {dimension_numbers = #tpu.dot_dimension_numbers<[1], [0], [0], [1], [0, 0, 1, 1], [], []>} : vector<2x128xf32>, vector<128x128xf32>, vector<2x128xf32> -> vector<2x128xf32>
    %cst_33 = arith.constant dense<0.000000e+00> : vector<2x128xf32>
    %66 = tpu.matmul %47, %10, %cst_33 {dimension_numbers = #tpu.dot_dimension_numbers<[1], [0], [0], [1], [0, 0, 1, 1], [], []>} : vector<2x128xf32>, vector<128x128xf32>, vector<2x128xf32> -> vector<2x128xf32>
    %67 = arith.addf %65, %66 : vector<2x128xf32>
    %68 = vector.broadcast %11 : vector<1x128xf32> to vector<2x128xf32>
    %69 = arith.addf %67, %68 : vector<2x128xf32>
    %70 = math.tanh %69 : vector<2x128xf32>
    %cst_34 = arith.constant dense<0xFF800000> : vector<128xf32>
    %71 = vector.multi_reduction <maximumf>, %70, %cst_34 [0] : vector<2x128xf32> to vector<128xf32>
    %72 = vector.shape_cast %71 : vector<128xf32> to vector<1x128xf32>
    %73 = vector.broadcast %72 : vector<1x128xf32> to vector<2x128xf32>
    %74 = arith.subf %70, %73 : vector<2x128xf32>
    %75 = math.exp %74 : vector<2x128xf32>
    %cst_35 = arith.constant dense<0.000000e+00> : vector<128xf32>
    %76 = vector.multi_reduction <add>, %75, %cst_35 [0] : vector<2x128xf32> to vector<128xf32>
    %77 = vector.shape_cast %76 : vector<128xf32> to vector<1x128xf32>
    %78 = vector.broadcast %77 : vector<1x128xf32> to vector<2x128xf32>
    %79 = arith.divf %75, %78 : vector<2x128xf32>
    %c0_36 = arith.constant 0 : index
    %c2 = arith.constant 2 : index
    %c0_37 = arith.constant 0 : index
    %80 = vector.load %arg7[%c0_36, %c2, %c0_37] : memref<2x8x128xf32, #tpu.memory_space<vmem>>, vector<2x1x128xf32>
    %81 = vector.shape_cast %80 : vector<2x1x128xf32> to vector<2x128xf32>
    %82 = vector.shape_cast %79 : vector<2x128xf32> to vector<2x1x128xf32>
    tpu.vector_store %arg7[%c0_36, %c2, %c0_37], %82 {strides = array<i32>} : memref<2x8x128xf32, #tpu.memory_space<vmem>>, vector<2x1x128xf32>,
    %83 = vector.extract_strided_slice %7 {offsets = [0, 3, 0], sizes = [2, 1, 128], strides = [1, 1, 1]} : vector<2x8x128xf32> to vector<2x1x128xf32>
    %84 = vector.shape_cast %83 : vector<2x1x128xf32> to vector<2x128xf32>
    %cst_38 = arith.constant dense<0.000000e+00> : vector<2x128xf32>
    %85 = tpu.matmul %64, %8, %cst_38 {dimension_numbers = #tpu.dot_dimension_numbers<[1], [0], [0], [1], [0, 0, 1, 1], [], []>} : vector<2x128xf32>, vector<128x128xf32>, vector<2x128xf32> -> vector<2x128xf32>
    %86 = arith.addf %84, %85 : vector<2x128xf32>
    %87 = math.tanh %86 : vector<2x128xf32>
    %cst_39 = arith.constant dense<0.000000e+00> : vector<2x128xf32>
    %88 = tpu.matmul %87, %9, %cst_39 {dimension_numbers = #tpu.dot_dimension_numbers<[1], [0], [0], [1], [0, 0, 1, 1], [], []>} : vector<2x128xf32>, vector<128x128xf32>, vector<2x128xf32> -> vector<2x128xf32>
    %cst_40 = arith.constant dense<0.000000e+00> : vector<2x128xf32>
    %89 = tpu.matmul %70, %10, %cst_40 {dimension_numbers = #tpu.dot_dimension_numbers<[1], [0], [0], [1], [0, 0, 1, 1], [], []>} : vector<2x128xf32>, vector<128x128xf32>, vector<2x128xf32> -> vector<2x128xf32>
    %90 = arith.addf %88, %89 : vector<2x128xf32>
    %91 = vector.broadcast %11 : vector<1x128xf32> to vector<2x128xf32>
    %92 = arith.addf %90, %91 : vector<2x128xf32>
    %93 = math.tanh %92 : vector<2x128xf32>
    %cst_41 = arith.constant dense<0xFF800000> : vector<128xf32>
    %94 = vector.multi_reduction <maximumf>, %93, %cst_41 [0] : vector<2x128xf32> to vector<128xf32>
    %95 = vector.shape_cast %94 : vector<128xf32> to vector<1x128xf32>
    %96 = vector.broadcast %95 : vector<1x128xf32> to vector<2x128xf32>
    %97 = arith.subf %93, %96 : vector<2x128xf32>
    %98 = math.exp %97 : vector<2x128xf32>
    %cst_42 = arith.constant dense<0.000000e+00> : vector<128xf32>
    %99 = vector.multi_reduction <add>, %98, %cst_42 [0] : vector<2x128xf32> to vector<128xf32>
    %100 = vector.shape_cast %99 : vector<128xf32> to vector<1x128xf32>
    %101 = vector.broadcast %100 : vector<1x128xf32> to vector<2x128xf32>
    %102 = arith.divf %98, %101 : vector<2x128xf32>
    %c0_43 = arith.constant 0 : index
    %c3 = arith.constant 3 : index
    %c0_44 = arith.constant 0 : index
    %103 = vector.load %arg7[%c0_43, %c3, %c0_44] : memref<2x8x128xf32, #tpu.memory_space<vmem>>, vector<2x1x128xf32>
    %104 = vector.shape_cast %103 : vector<2x1x128xf32> to vector<2x128xf32>
    %105 = vector.shape_cast %102 : vector<2x128xf32> to vector<2x1x128xf32>
    tpu.vector_store %arg7[%c0_43, %c3, %c0_44], %105 {strides = array<i32>} : memref<2x8x128xf32, #tpu.memory_space<vmem>>, vector<2x1x128xf32>,
    %106 = vector.extract_strided_slice %7 {offsets = [0, 4, 0], sizes = [2, 1, 128], strides = [1, 1, 1]} : vector<2x8x128xf32> to vector<2x1x128xf32>
    %107 = vector.shape_cast %106 : vector<2x1x128xf32> to vector<2x128xf32>
    %cst_45 = arith.constant dense<0.000000e+00> : vector<2x128xf32>
    %108 = tpu.matmul %87, %8, %cst_45 {dimension_numbers = #tpu.dot_dimension_numbers<[1], [0], [0], [1], [0, 0, 1, 1], [], []>} : vector<2x128xf32>, vector<128x128xf32>, vector<2x128xf32> -> vector<2x128xf32>
    %109 = arith.addf %107, %108 : vector<2x128xf32>
    %110 = math.tanh %109 : vector<2x128xf32>
    %cst_46 = arith.constant dense<0.000000e+00> : vector<2x128xf32>
    %111 = tpu.matmul %110, %9, %cst_46 {dimension_numbers = #tpu.dot_dimension_numbers<[1], [0], [0], [1], [0, 0, 1, 1], [], []>} : vector<2x128xf32>, vector<128x128xf32>, vector<2x128xf32> -> vector<2x128xf32>
    %cst_47 = arith.constant dense<0.000000e+00> : vector<2x128xf32>
    %112 = tpu.matmul %93, %10, %cst_47 {dimension_numbers = #tpu.dot_dimension_numbers<[1], [0], [0], [1], [0, 0, 1, 1], [], []>} : vector<2x128xf32>, vector<128x128xf32>, vector<2x128xf32> -> vector<2x128xf32>
    %113 = arith.addf %111, %112 : vector<2x128xf32>
    %114 = vector.broadcast %11 : vector<1x128xf32> to vector<2x128xf32>
    %115 = arith.addf %113, %114 : vector<2x128xf32>
    %116 = math.tanh %115 : vector<2x128xf32>
    %cst_48 = arith.constant dense<0xFF800000> : vector<128xf32>
    %117 = vector.multi_reduction <maximumf>, %116, %cst_48 [0] : vector<2x128xf32> to vector<128xf32>
    %118 = vector.shape_cast %117 : vector<128xf32> to vector<1x128xf32>
    %119 = vector.broadcast %118 : vector<1x128xf32> to vector<2x128xf32>
    %120 = arith.subf %116, %119 : vector<2x128xf32>
    %121 = math.exp %120 : vector<2x128xf32>
    %cst_49 = arith.constant dense<0.000000e+00> : vector<128xf32>
    %122 = vector.multi_reduction <add>, %121, %cst_49 [0] : vector<2x128xf32> to vector<128xf32>
    %123 = vector.shape_cast %122 : vector<128xf32> to vector<1x128xf32>
    %124 = vector.broadcast %123 : vector<1x128xf32> to vector<2x128xf32>
    %125 = arith.divf %121, %124 : vector<2x128xf32>
    %c0_50 = arith.constant 0 : index
    %c4 = arith.constant 4 : index
    %c0_51 = arith.constant 0 : index
    %126 = vector.load %arg7[%c0_50, %c4, %c0_51] : memref<2x8x128xf32, #tpu.memory_space<vmem>>, vector<2x1x128xf32>
    %127 = vector.shape_cast %126 : vector<2x1x128xf32> to vector<2x128xf32>
    %128 = vector.shape_cast %125 : vector<2x128xf32> to vector<2x1x128xf32>
    tpu.vector_store %arg7[%c0_50, %c4, %c0_51], %128 {strides = array<i32>} : memref<2x8x128xf32, #tpu.memory_space<vmem>>, vector<2x1x128xf32>,
    %129 = vector.extract_strided_slice %7 {offsets = [0, 5, 0], sizes = [2, 1, 128], strides = [1, 1, 1]} : vector<2x8x128xf32> to vector<2x1x128xf32>
    %130 = vector.shape_cast %129 : vector<2x1x128xf32> to vector<2x128xf32>
    %cst_52 = arith.constant dense<0.000000e+00> : vector<2x128xf32>
    %131 = tpu.matmul %110, %8, %cst_52 {dimension_numbers = #tpu.dot_dimension_numbers<[1], [0], [0], [1], [0, 0, 1, 1], [], []>} : vector<2x128xf32>, vector<128x128xf32>, vector<2x128xf32> -> vector<2x128xf32>
    %132 = arith.addf %130, %131 : vector<2x128xf32>
    %133 = math.tanh %132 : vector<2x128xf32>
    %cst_53 = arith.constant dense<0.000000e+00> : vector<2x128xf32>
    %134 = tpu.matmul %133, %9, %cst_53 {dimension_numbers = #tpu.dot_dimension_numbers<[1], [0], [0], [1], [0, 0, 1, 1], [], []>} : vector<2x128xf32>, vector<128x128xf32>, vector<2x128xf32> -> vector<2x128xf32>
    %cst_54 = arith.constant dense<0.000000e+00> : vector<2x128xf32>
    %135 = tpu.matmul %116, %10, %cst_54 {dimension_numbers = #tpu.dot_dimension_numbers<[1], [0], [0], [1], [0, 0, 1, 1], [], []>} : vector<2x128xf32>, vector<128x128xf32>, vector<2x128xf32> -> vector<2x128xf32>
    %136 = arith.addf %134, %135 : vector<2x128xf32>
    %137 = vector.broadcast %11 : vector<1x128xf32> to vector<2x128xf32>
    %138 = arith.addf %136, %137 : vector<2x128xf32>
    %139 = math.tanh %138 : vector<2x128xf32>
    %cst_55 = arith.constant dense<0xFF800000> : vector<128xf32>
    %140 = vector.multi_reduction <maximumf>, %139, %cst_55 [0] : vector<2x128xf32> to vector<128xf32>
    %141 = vector.shape_cast %140 : vector<128xf32> to vector<1x128xf32>
    %142 = vector.broadcast %141 : vector<1x128xf32> to vector<2x128xf32>
    %143 = arith.subf %139, %142 : vector<2x128xf32>
    %144 = math.exp %143 : vector<2x128xf32>
    %cst_56 = arith.constant dense<0.000000e+00> : vector<128xf32>
    %145 = vector.multi_reduction <add>, %144, %cst_56 [0] : vector<2x128xf32> to vector<128xf32>
    %146 = vector.shape_cast %145 : vector<128xf32> to vector<1x128xf32>
    %147 = vector.broadcast %146 : vector<1x128xf32> to vector<2x128xf32>
    %148 = arith.divf %144, %147 : vector<2x128xf32>
    %c0_57 = arith.constant 0 : index
    %c5 = arith.constant 5 : index
    %c0_58 = arith.constant 0 : index
    %149 = vector.load %arg7[%c0_57, %c5, %c0_58] : memref<2x8x128xf32, #tpu.memory_space<vmem>>, vector<2x1x128xf32>
    %150 = vector.shape_cast %149 : vector<2x1x128xf32> to vector<2x128xf32>
    %151 = vector.shape_cast %148 : vector<2x128xf32> to vector<2x1x128xf32>
    tpu.vector_store %arg7[%c0_57, %c5, %c0_58], %151 {strides = array<i32>} : memref<2x8x128xf32, #tpu.memory_space<vmem>>, vector<2x1x128xf32>,
    %152 = vector.extract_strided_slice %7 {offsets = [0, 6, 0], sizes = [2, 1, 128], strides = [1, 1, 1]} : vector<2x8x128xf32> to vector<2x1x128xf32>
    %153 = vector.shape_cast %152 : vector<2x1x128xf32> to vector<2x128xf32>
    %cst_59 = arith.constant dense<0.000000e+00> : vector<2x128xf32>
    %154 = tpu.matmul %133, %8, %cst_59 {dimension_numbers = #tpu.dot_dimension_numbers<[1], [0], [0], [1], [0, 0, 1, 1], [], []>} : vector<2x128xf32>, vector<128x128xf32>, vector<2x128xf32> -> vector<2x128xf32>
    %155 = arith.addf %153, %154 : vector<2x128xf32>
    %156 = math.tanh %155 : vector<2x128xf32>
    %cst_60 = arith.constant dense<0.000000e+00> : vector<2x128xf32>
    %157 = tpu.matmul %156, %9, %cst_60 {dimension_numbers = #tpu.dot_dimension_numbers<[1], [0], [0], [1], [0, 0, 1, 1], [], []>} : vector<2x128xf32>, vector<128x128xf32>, vector<2x128xf32> -> vector<2x128xf32>
    %cst_61 = arith.constant dense<0.000000e+00> : vector<2x128xf32>
    %158 = tpu.matmul %139, %10, %cst_61 {dimension_numbers = #tpu.dot_dimension_numbers<[1], [0], [0], [1], [0, 0, 1, 1], [], []>} : vector<2x128xf32>, vector<128x128xf32>, vector<2x128xf32> -> vector<2x128xf32>
    %159 = arith.addf %157, %158 : vector<2x128xf32>
    %160 = vector.broadcast %11 : vector<1x128xf32> to vector<2x128xf32>
    %161 = arith.addf %159, %160 : vector<2x128xf32>
    %162 = math.tanh %161 : vector<2x128xf32>
    %cst_62 = arith.constant dense<0xFF800000> : vector<128xf32>
    %163 = vector.multi_reduction <maximumf>, %162, %cst_62 [0] : vector<2x128xf32> to vector<128xf32>
    %164 = vector.shape_cast %163 : vector<128xf32> to vector<1x128xf32>
    %165 = vector.broadcast %164 : vector<1x128xf32> to vector<2x128xf32>
    %166 = arith.subf %162, %165 : vector<2x128xf32>
    %167 = math.exp %166 : vector<2x128xf32>
    %cst_63 = arith.constant dense<0.000000e+00> : vector<128xf32>
    %168 = vector.multi_reduction <add>, %167, %cst_63 [0] : vector<2x128xf32> to vector<128xf32>
    %169 = vector.shape_cast %168 : vector<128xf32> to vector<1x128xf32>
    %170 = vector.broadcast %169 : vector<1x128xf32> to vector<2x128xf32>
    %171 = arith.divf %167, %170 : vector<2x128xf32>
    %c0_64 = arith.constant 0 : index
    %c6 = arith.constant 6 : index
    %c0_65 = arith.constant 0 : index
    %172 = vector.load %arg7[%c0_64, %c6, %c0_65] : memref<2x8x128xf32, #tpu.memory_space<vmem>>, vector<2x1x128xf32>
    %173 = vector.shape_cast %172 : vector<2x1x128xf32> to vector<2x128xf32>
    %174 = vector.shape_cast %171 : vector<2x128xf32> to vector<2x1x128xf32>
    tpu.vector_store %arg7[%c0_64, %c6, %c0_65], %174 {strides = array<i32>} : memref<2x8x128xf32, #tpu.memory_space<vmem>>, vector<2x1x128xf32>,
    %175 = vector.extract_strided_slice %7 {offsets = [0, 7, 0], sizes = [2, 1, 128], strides = [1, 1, 1]} : vector<2x8x128xf32> to vector<2x1x128xf32>
    %176 = vector.shape_cast %175 : vector<2x1x128xf32> to vector<2x128xf32>
    %cst_66 = arith.constant dense<0.000000e+00> : vector<2x128xf32>
    %177 = tpu.matmul %156, %8, %cst_66 {dimension_numbers = #tpu.dot_dimension_numbers<[1], [0], [0], [1], [0, 0, 1, 1], [], []>} : vector<2x128xf32>, vector<128x128xf32>, vector<2x128xf32> -> vector<2x128xf32>
    %178 = arith.addf %176, %177 : vector<2x128xf32>
    %179 = math.tanh %178 : vector<2x128xf32>
    %cst_67 = arith.constant dense<0.000000e+00> : vector<2x128xf32>
    %180 = tpu.matmul %179, %9, %cst_67 {dimension_numbers = #tpu.dot_dimension_numbers<[1], [0], [0], [1], [0, 0, 1, 1], [], []>} : vector<2x128xf32>, vector<128x128xf32>, vector<2x128xf32> -> vector<2x128xf32>
    %cst_68 = arith.constant dense<0.000000e+00> : vector<2x128xf32>
    %181 = tpu.matmul %162, %10, %cst_68 {dimension_numbers = #tpu.dot_dimension_numbers<[1], [0], [0], [1], [0, 0, 1, 1], [], []>} : vector<2x128xf32>, vector<128x128xf32>, vector<2x128xf32> -> vector<2x128xf32>
    %182 = arith.addf %180, %181 : vector<2x128xf32>
    %183 = vector.broadcast %11 : vector<1x128xf32> to vector<2x128xf32>
    %184 = arith.addf %182, %183 : vector<2x128xf32>
    %185 = math.tanh %184 : vector<2x128xf32>
    %cst_69 = arith.constant dense<0xFF800000> : vector<128xf32>
    %186 = vector.multi_reduction <maximumf>, %185, %cst_69 [0] : vector<2x128xf32> to vector<128xf32>
    %187 = vector.shape_cast %186 : vector<128xf32> to vector<1x128xf32>
    %188 = vector.broadcast %187 : vector<1x128xf32> to vector<2x128xf32>
    %189 = arith.subf %185, %188 : vector<2x128xf32>
    %190 = math.exp %189 : vector<2x128xf32>
    %cst_70 = arith.constant dense<0.000000e+00> : vector<128xf32>
    %191 = vector.multi_reduction <add>, %190, %cst_70 [0] : vector<2x128xf32> to vector<128xf32>
    %192 = vector.shape_cast %191 : vector<128xf32> to vector<1x128xf32>
    %193 = vector.broadcast %192 : vector<1x128xf32> to vector<2x128xf32>
    %194 = arith.divf %190, %193 : vector<2x128xf32>
    %c0_71 = arith.constant 0 : index
    %c7 = arith.constant 7 : index
    %c0_72 = arith.constant 0 : index
    %195 = vector.load %arg7[%c0_71, %c7, %c0_72] : memref<2x8x128xf32, #tpu.memory_space<vmem>>, vector<2x1x128xf32>
    %196 = vector.shape_cast %195 : vector<2x1x128xf32> to vector<2x128xf32>
    %197 = vector.shape_cast %194 : vector<2x128xf32> to vector<2x1x128xf32>
    tpu.vector_store %arg7[%c0_71, %c7, %c0_72], %197 {strides = array<i32>} : memref<2x8x128xf32, #tpu.memory_space<vmem>>, vector<2x1x128xf32>,
    return
  }
}

</mosaic_0001>

<llo_original>
// kernel: tpu_custom_call.1
$region0: #{tpu_custom_call.1}
  #allocation0 [shape = 'u32[]', space=smem, size = 0x4, offset = 0x4, fixed_abs, tag = 'smem constant byte address 0x4 - core index']
  #allocation1 [shape = 'u32[144,128]{1,0:T(1,128)}', space=vmem, size = 0x12000, scoped, tag = 'internal scratch']
  %s0 = inlined_call_operand.hbm [shape: f32[2,8,256], index: 0, kind: input, shape index: {}]
  %s1 = inlined_call_operand.hbm [shape: f32[256,128], index: 1, kind: input, shape index: {}]
  %s2 = inlined_call_operand.vmem [shape: f32[1,128], index: 2, kind: input, shape index: {}]
  %s3 = inlined_call_operand.hbm [shape: f32[128,128], index: 3, kind: input, shape index: {}]
  %s4 = inlined_call_operand.hbm [shape: f32[128,128], index: 4, kind: input, shape index: {}]
  %s5 = inlined_call_operand.hbm [shape: f32[128,128], index: 5, kind: input, shape index: {}]
  %s6 = inlined_call_operand.vmem [shape: f32[1,128], index: 6, kind: input, shape index: {}]
  %s7 = inlined_call_operand.hbm [shape: f32[2,8,128], index: 7, kind: output, shape index: {}]
  %s8 = sld [smem:[#allocation0]]
  $region58: #{tpu_custom_call.1} parent=0
    _
  %s10 = ssub.s32 1, %s8
  %s11 = scalar_select 0, %s10, %s8
  $region1: #{tpu_custom_call.1} parent=0
    #allocation2 [shape = 'u8[16384]{0}', space=vmem, size = 0x4000, scoped, tag = 'input window, operand 0, single buffered']
    #allocation3 [shape = 's32[1]{0}', space=sflag, size = 0x4, scoped, tag = 'scoped memory for tpu_custom_call.1']
    #allocation4 [shape = 's32[1]{0}', space=sflag, size = 0x4, scoped, tag = 'scoped memory for tpu_custom_call.1']
    #allocation5 [shape = 'u8[131072]{0}', space=vmem, size = 0x20000, scoped, tag = 'input window, operand 1, single buffered']
    #allocation6 [shape = 's32[1]{0}', space=sflag, size = 0x4, scoped, tag = 'scoped memory for tpu_custom_call.1']
    #allocation7 [shape = 'u8[65536]{0}', space=vmem, size = 0x10000, scoped, tag = 'input window, operand 3, single buffered']
    #allocation8 [shape = 'u8[65536]{0}', space=vmem, size = 0x10000, scoped, tag = 'input window, operand 4, single buffered']
    #allocation9 [shape = 's32[1]{0}', space=sflag, size = 0x4, scoped, tag = 'scoped memory for tpu_custom_call.1']
    #allocation10 [shape = 'u8[65536]{0}', space=vmem, size = 0x10000, scoped, tag = 'input window, operand 5, single buffered']
    #allocation11 [shape = 'u8[8192]{0}', space=vmem, size = 0x2000, scoped, tag = 'output window, operand 0, single buffered']
    %12 = vsyncpa [#allocation3], 0
    %13 = vsyncpa [#allocation6], 0
    %14 = vsyncpa [#allocation9], 0
    %15 = vsyncpa [#allocation4], 0
    // Predicated region
    $region2: #{tpu_custom_call.1} parent=1 // pred_check
      _
    $region3: #{tpu_custom_call.1} parent=1 // pred_check_branch
      %17 = sbr.rel (0) target = $region5
    $region4: #{tpu_custom_call.1} parent=1 // pred_region
      %s19 = ssub.s32 512, 512
      %20 = vsyncadd [#allocation3], %s19
      %s21 = sshll.u32 [#allocation2], 4
      %s22 = int_to_ptr.vmem [resolvable:$true] %s21
      %27 = dma.hbm_to_vmem [thread:$0]  %s0, 512, %s22, [#allocation3], 256, 256, 16
    $region5: #{tpu_custom_call.1} parent=1 // pred_fallthru
      _
    // Predicated region
    $region6: #{tpu_custom_call.1} parent=1 // pred_check
      _
    $region7: #{tpu_custom_call.1} parent=1 // pred_check_branch
      %29 = sbr.rel (0) target = $region9
    $region8: #{tpu_custom_call.1} parent=1 // pred_region
      %s31 = ssub.s32 4096, 4096
      %32 = vsyncadd [#allocation6], %s31
      %s33 = sshll.u32 [#allocation5], 4
      %s34 = int_to_ptr.vmem [resolvable:$true] %s33
      %39 = dma.hbm_to_vmem [thread:$0]  %s1, 4096, %s34, [#allocation6], 128, 128, 8
    $region9: #{tpu_custom_call.1} parent=1 // pred_fallthru
      _
    // Predicated region
    $region10: #{tpu_custom_call.1} parent=1 // pred_check
      _
    $region11: #{tpu_custom_call.1} parent=1 // pred_check_branch
      %41 = sbr.rel (0) target = $region13
    $region12: #{tpu_custom_call.1} parent=1 // pred_region
      _
    $region13: #{tpu_custom_call.1} parent=1 // pred_fallthru
      _
    // Predicated region
    $region14: #{tpu_custom_call.1} parent=1 // pred_check
      _
    $region15: #{tpu_custom_call.1} parent=1 // pred_check_branch
      %43 = sbr.rel (0) target = $region17
    $region16: #{tpu_custom_call.1} parent=1 // pred_region
      %s45 = ssub.s32 2048, 2048
      %46 = vsyncadd [#allocation6], %s45
      %s47 = sshll.u32 [#allocation7], 4
      %s48 = int_to_ptr.vmem [resolvable:$true] %s47
      %53 = dma.hbm_to_vmem [thread:$0]  %s3, 2048, %s48, [#allocation6], 128, 128, 8
    $region17: #{tpu_custom_call.1} parent=1 // pred_fallthru
      _
    // Predicated region
    $region18: #{tpu_custom_call.1} parent=1 // pred_check
      _
    $region19: #{tpu_custom_call.1} parent=1 // pred_check_branch
      %55 = sbr.rel (0) target = $region21
    $region20: #{tpu_custom_call.1} parent=1 // pred_region
      %s57 = ssub.s32 2048, 2048
      %58 = vsyncadd [#allocation9], %s57
      %s59 = sshll.u32 [#allocation8], 4
      %s60 = int_to_ptr.vmem [resolvable:$true] %s59
      %65 = dma.hbm_to_vmem [thread:$0]  %s4, 2048, %s60, [#allocation9], 128, 128, 8
    $region21: #{tpu_custom_call.1} parent=1 // pred_fallthru
      _
    // Predicated region
    $region22: #{tpu_custom_call.1} parent=1 // pred_check
      _
    $region23: #{tpu_custom_call.1} parent=1 // pred_check_branch
      %67 = sbr.rel (0) target = $region25
    $region24: #{tpu_custom_call.1} parent=1 // pred_region
      %s69 = ssub.s32 2048, 2048
      %70 = vsyncadd [#allocation9], %s69
      %s71 = sshll.u32 [#allocation10], 4
      %s72 = int_to_ptr.vmem [resolvable:$true] %s71
      %77 = dma.hbm_to_vmem [thread:$0]  %s5, 2048, %s72, [#allocation9], 128, 128, 8
    $region25: #{tpu_custom_call.1} parent=1 // pred_fallthru
      _
    // Predicated region
    $region26: #{tpu_custom_call.1} parent=1 // pred_check
      _
    $region27: #{tpu_custom_call.1} parent=1 // pred_check_branch
      %79 = sbr.rel (0) target = $region29
    $region28: #{tpu_custom_call.1} parent=1 // pred_region
      _
    $region29: #{tpu_custom_call.1} parent=1 // pred_fallthru
      _
    // Predicated region
    $region30: #{tpu_custom_call.1} parent=1 // pred_check
      _
    $region31: #{tpu_custom_call.1} parent=1 // pred_check_branch
      %81 = sbr.rel (0) target = $region33
    $region32: #{tpu_custom_call.1} parent=1 // pred_region
      %82 = dma.done [#allocation3], 512
    $region33: #{tpu_custom_call.1} parent=1 // pred_fallthru
      _
    // Predicated region
    $region34: #{tpu_custom_call.1} parent=1 // pred_check
      _
    $region35: #{tpu_custom_call.1} parent=1 // pred_check_branch
      %84 = sbr.rel (0) target = $region37
    $region36: #{tpu_custom_call.1} parent=1 // pred_region
      %85 = dma.done [#allocation6], 4096
    $region37: #{tpu_custom_call.1} parent=1 // pred_fallthru
      _
    // Predicated region
    $region38: #{tpu_custom_call.1} parent=1 // pred_check
      _
    $region39: #{tpu_custom_call.1} parent=1 // pred_check_branch
      %87 = sbr.rel (0) target = $region41
    $region40: #{tpu_custom_call.1} parent=1 // pred_region
      %88 = dma.done [#allocation6], 2048
    $region41: #{tpu_custom_call.1} parent=1 // pred_fallthru
      _
    // Predicated region
    $region42: #{tpu_custom_call.1} parent=1 // pred_check
      _
    $region43: #{tpu_custom_call.1} parent=1 // pred_check_branch
      %90 = sbr.rel (0) target = $region45
    $region44: #{tpu_custom_call.1} parent=1 // pred_region
      %91 = dma.done [#allocation9], 2048
    $region45: #{tpu_custom_call.1} parent=1 // pred_fallthru
      _
    // Predicated region
    $region46: #{tpu_custom_call.1} parent=1 // pred_check
      _
    $region47: #{tpu_custom_call.1} parent=1 // pred_check_branch
      %93 = sbr.rel (0) target = $region49
    $region48: #{tpu_custom_call.1} parent=1 // pred_region
      %94 = dma.done [#allocation9], 2048
    $region49: #{tpu_custom_call.1} parent=1 // pred_fallthru
      _
    %v95 = vld [vmem:[#allocation2] sm:$0xff]
    %v96 = vld [vmem:[#allocation2 + $0x8] sm:$0xff]
    %v97 = vld [vmem:[#allocation2 + $0x10] sm:$0xff]
    %v98 = vld [vmem:[#allocation2 + $0x18] sm:$0xff]
    %v99 = vld [vmem:[#allocation5] sm:$0xff]
    %v100 = vld [vmem:[#allocation5 + $0x8] sm:$0xff]
    %v101 = vld [vmem:[#allocation5 + $0x10] sm:$0xff]
    %v102 = vld [vmem:[#allocation5 + $0x18] sm:$0xff]
    %v103 = vld [vmem:[#allocation5 + $0x20] sm:$0xff]
    %v104 = vld [vmem:[#allocation5 + $0x28] sm:$0xff]
    %v105 = vld [vmem:[#allocation5 + $0x30] sm:$0xff]
    %v106 = vld [vmem:[#allocation5 + $0x38] sm:$0xff]
    %v107 = vld [vmem:[#allocation5 + $0x40] sm:$0xff]
    %v108 = vld [vmem:[#allocation5 + $0x48] sm:$0xff]
    %v109 = vld [vmem:[#allocation5 + $0x50] sm:$0xff]
    %v110 = vld [vmem:[#allocation5 + $0x58] sm:$0xff]
    %v111 = vld [vmem:[#allocation5 + $0x60] sm:$0xff]
    %v112 = vld [vmem:[#allocation5 + $0x68] sm:$0xff]
    %v113 = vld [vmem:[#allocation5 + $0x70] sm:$0xff]
    %v114 = vld [vmem:[#allocation5 + $0x78] sm:$0xff]
    %v115 = vld [vmem:[#allocation5 + $0x80] sm:$0xff]
    %v116 = vld [vmem:[#allocation5 + $0x88] sm:$0xff]
    %v117 = vld [vmem:[#allocation5 + $0x90] sm:$0xff]
    %v118 = vld [vmem:[#allocation5 + $0x98] sm:$0xff]
    %v119 = vld [vmem:[#allocation5 + $0xa0] sm:$0xff]
    %v120 = vld [vmem:[#allocation5 + $0xa8] sm:$0xff]
    %v121 = vld [vmem:[#allocation5 + $0xb0] sm:$0xff]
    %v122 = vld [vmem:[#allocation5 + $0xb8] sm:$0xff]
    %v123 = vld [vmem:[#allocation5 + $0xc0] sm:$0xff]
    %v124 = vld [vmem:[#allocation5 + $0xc8] sm:$0xff]
    %v125 = vld [vmem:[#allocation5 + $0xd0] sm:$0xff]
    %v126 = vld [vmem:[#allocation5 + $0xd8] sm:$0xff]
    %v127 = vld [vmem:[#allocation5 + $0xe0] sm:$0xff]
    %v128 = vld [vmem:[#allocation5 + $0xe8] sm:$0xff]
    %v129 = vld [vmem:[#allocation5 + $0xf0] sm:$0xff]
    %v130 = vld [vmem:[#allocation5 + $0xf8] sm:$0xff]
    %v131 = vld [vmem:[%s2] sm:$0x1]
    %v133 = vlaneseq
    %v134 = vshrl.u32 %v133, 7
    %v135 = vsub.s32 0, %v134
    %v136 = vrot.slane %v131, %v135
    %138 = vmatprep.subr.mxu0 0.0
    %139 = vmatpush1.msra.mxu0 %v99
    %140 = vmatprep.subr.mxu0 0.0
    %141 = vmatpush1.msra.mxu0 %v100
    %142 = vmatprep.subr.mxu0 0.0
    %143 = vmatpush1.msra.mxu0 %v101
    %144 = vmatprep.subr.mxu0 0.0
    %145 = vmatpush1.msra.mxu0 %v102
    %146 = vmatprep.subr.mxu0 0.0
    %147 = vmatpush1.msra.mxu0 %v103
    %148 = vmatprep.subr.mxu0 0.0
    %149 = vmatpush1.msra.mxu0 %v104
    %150 = vmatprep.subr.mxu0 0.0
    %151 = vmatpush1.msra.mxu0 %v105
    %152 = vmatprep.subr.mxu0 0.0
    %153 = vmatpush1.msra.mxu0 %v106
    %154 = vmatprep.subr.mxu0 0.0
    %155 = vmatpush1.msra.mxu0 %v107
    %156 = vmatprep.subr.mxu0 0.0
    %157 = vmatpush1.msra.mxu0 %v108
    %158 = vmatprep.subr.mxu0 0.0
    %159 = vmatpush1.msra.mxu0 %v109
    %160 = vmatprep.subr.mxu0 0.0
    %161 = vmatpush1.msra.mxu0 %v110
    %162 = vmatprep.subr.mxu0 0.0
    %163 = vmatpush1.msra.mxu0 %v111
    %164 = vmatprep.subr.mxu0 0.0
    %165 = vmatpush1.msra.mxu0 %v112
    %166 = vmatprep.subr.mxu0 0.0
    %167 = vmatpush1.msra.mxu0 %v113
    %168 = vmatprep.subr.mxu0 0.0
    %169 = vmatpush1.msra.mxu0 %v114
    %170 = vmatprep.subr.mxu0 0.0
    %171 = vmatpush1.msra.mxu0 %v115
    %172 = vmatprep.subr.mxu0 0.0
    %173 = vmatpush1.msra.mxu0 %v116
    %174 = vmatprep.subr.mxu0 0.0
    %175 = vmatpush1.msra.mxu0 %v117
    %176 = vmatprep.subr.mxu0 0.0
    %177 = vmatpush1.msra.mxu0 %v118
    %178 = vmatprep.subr.mxu0 0.0
    %179 = vmatpush1.msra.mxu0 %v119
    %180 = vmatprep.subr.mxu0 0.0
    %181 = vmatpush1.msra.mxu0 %v120
    %182 = vmatprep.subr.mxu0 0.0
    %183 = vmatpush1.msra.mxu0 %v121
    %184 = vmatprep.subr.mxu0 0.0
    %185 = vmatpush1.msra.mxu0 %v122
    %186 = vmatprep.subr.mxu0 0.0
    %187 = vmatpush1.msra.mxu0 %v123
    %188 = vmatprep.subr.mxu0 0.0
    %189 = vmatpush1.msra.mxu0 %v124
    %190 = vmatprep.subr.mxu0 0.0
    %191 = vmatpush1.msra.mxu0 %v125
    %192 = vmatprep.subr.mxu0 0.0
    %193 = vmatpush1.msra.mxu0 %v126
    %194 = vmatprep.subr.mxu0 0.0
    %195 = vmatpush1.msra.mxu0 %v127
    %196 = vmatprep.subr.mxu0 0.0
    %197 = vmatpush1.msra.mxu0 %v128
    %198 = vmatprep.subr.mxu0 0.0
    %199 = vmatpush1.msra.mxu0 %v129
    %200 = vmatprep.subr.mxu0 0.0
    %201 = vmatpush1.msra.mxu0 %v130
    %202 = vmatprep.mubr.f32.mxu0 %v96
    %203 = vmatmul.mubr.f32.gmra.mrb[0].mxu0 %v95
    %v204 = vpop.f32.mrb[0].mxu0
    %v205 = vadd.f32 %v136, %v204
    %v206 = vpop.f32.mrb[0].mxu0
    %207 = vmatprep.mubr.f32.mxu0 %v98
    %208 = vmatmul.mubr.f32.gmra.mrb[0].mxu0 %v97
    %v209 = vpop.f32.mrb[0].mxu0
    %v210 = vadd.f32 %v136, %v209
    %v211 = vpop.f32.mrb[0].mxu0
    %212 = vdwg.mxu0
    %v213 = vld [vmem:[#allocation7] sm:$0xff]
    %v214 = vld [vmem:[#allocation7 + $0x8] sm:$0xff]
    %v215 = vld [vmem:[#allocation7 + $0x10] sm:$0xff]
    %v216 = vld [vmem:[#allocation7 + $0x18] sm:$0xff]
    %v217 = vld [vmem:[#allocation7 + $0x20] sm:$0xff]
    %v218 = vld [vmem:[#allocation7 + $0x28] sm:$0xff]
    %v219 = vld [vmem:[#allocation7 + $0x30] sm:$0xff]
    %v220 = vld [vmem:[#allocation7 + $0x38] sm:$0xff]
    %v221 = vld [vmem:[#allocation7 + $0x40] sm:$0xff]
    %v222 = vld [vmem:[#allocation7 + $0x48] sm:$0xff]
    %v223 = vld [vmem:[#allocation7 + $0x50] sm:$0xff]
    %v224 = vld [vmem:[#allocation7 + $0x58] sm:$0xff]
    %v225 = vld [vmem:[#allocation7 + $0x60] sm:$0xff]
    %v226 = vld [vmem:[#allocation7 + $0x68] sm:$0xff]
    %v227 = vld [vmem:[#allocation7 + $0x70] sm:$0xff]
    %v228 = vld [vmem:[#allocation7 + $0x78] sm:$0xff]
    %v229 = vld [vmem:[#allocation8] sm:$0xff]
    %v230 = vld [vmem:[#allocation8 + $0x8] sm:$0xff]
    %v231 = vld [vmem:[#allocation8 + $0x10] sm:$0xff]
    %v232 = vld [vmem:[#allocation8 + $0x18] sm:$0xff]
    %v233 = vld [vmem:[#allocation8 + $0x20] sm:$0xff]
    %v234 = vld [vmem:[#allocation8 + $0x28] sm:$0xff]
    %v235 = vld [vmem:[#allocation8 + $0x30] sm:$0xff]
    %v236 = vld [vmem:[#allocation8 + $0x38] sm:$0xff]
    %v237 = vld [vmem:[#allocation8 + $0x40] sm:$0xff]
    %v238 = vld [vmem:[#allocation8 + $0x48] sm:$0xff]
    %v239 = vld [vmem:[#allocation8 + $0x50] sm:$0xff]
    %v240 = vld [vmem:[#allocation8 + $0x58] sm:$0xff]
    %v241 = vld [vmem:[#allocation8 + $0x60] sm:$0xff]
    %v242 = vld [vmem:[#allocation8 + $0x68] sm:$0xff]
    %v243 = vld [vmem:[#allocation8 + $0x70] sm:$0xff]
    %v244 = vld [vmem:[#allocation8 + $0x78] sm:$0xff]
    %v245 = vld [vmem:[#allocation10] sm:$0xff]
    %v246 = vld [vmem:[#allocation10 + $0x8] sm:$0xff]
    %v247 = vld [vmem:[#allocation10 + $0x10] sm:$0xff]
    %v248 = vld [vmem:[#allocation10 + $0x18] sm:$0xff]
    %v249 = vld [vmem:[#allocation10 + $0x20] sm:$0xff]
    %v250 = vld [vmem:[#allocation10 + $0x28] sm:$0xff]
    %v251 = vld [vmem:[#allocation10 + $0x30] sm:$0xff]
    %v252 = vld [vmem:[#allocation10 + $0x38] sm:$0xff]
    %v253 = vld [vmem:[#allocation10 + $0x40] sm:$0xff]
    %v254 = vld [vmem:[#allocation10 + $0x48] sm:$0xff]
    %v255 = vld [vmem:[#allocation10 + $0x50] sm:$0xff]
    %v256 = vld [vmem:[#allocation10 + $0x58] sm:$0xff]
    %v257 = vld [vmem:[#allocation10 + $0x60] sm:$0xff]
    %v258 = vld [vmem:[#allocation10 + $0x68] sm:$0xff]
    %v259 = vld [vmem:[#allocation10 + $0x70] sm:$0xff]
    %v260 = vld [vmem:[#allocation10 + $0x78] sm:$0xff]
    %v261 = vld [vmem:[%s6] sm:$0x1]
    %262 = vmatprep.subr.mxu0 0.0
    %263 = vmatpush1.msra.mxu0 %v213
    %264 = vmatprep.subr.mxu0 0.0
    %265 = vmatpush1.msra.mxu0 %v214
    %266 = vmatprep.subr.mxu0 0.0
    %267 = vmatpush1.msra.mxu0 %v215
    %268 = vmatprep.subr.mxu0 0.0
    %269 = vmatpush1.msra.mxu0 %v216
    %270 = vmatprep.subr.mxu0 0.0
    %271 = vmatpush1.msra.mxu0 %v217
    %272 = vmatprep.subr.mxu0 0.0
    %273 = vmatpush1.msra.mxu0 %v218
    %274 = vmatprep.subr.mxu0 0.0
    %275 = vmatpush1.msra.mxu0 %v219
    %276 = vmatprep.subr.mxu0 0.0
    %277 = vmatpush1.msra.mxu0 %v220
    %278 = vmatprep.subr.mxu0 0.0
    %279 = vmatpush1.msra.mxu0 %v221
    %280 = vmatprep.subr.mxu0 0.0
    %281 = vmatpush1.msra.mxu0 %v222
    %282 = vmatprep.subr.mxu0 0.0
    %283 = vmatpush1.msra.mxu0 %v223
    %284 = vmatprep.subr.mxu0 0.0
    %285 = vmatpush1.msra.mxu0 %v224
    %286 = vmatprep.subr.mxu0 0.0
    %287 = vmatpush1.msra.mxu0 %v225
    %288 = vmatprep.subr.mxu0 0.0
    %289 = vmatpush1.msra.mxu0 %v226
    %290 = vmatprep.subr.mxu0 0.0
    %291 = vmatpush1.msra.mxu0 %v227
    %292 = vmatprep.subr.mxu0 0.0
    %293 = vmatpush1.msra.mxu0 %v228
    %294 = vmatprep.subr.mxu0 0.0
    %295 = vmatpush1.msra.mxu0 0.0
    %296 = vmatprep.subr.mxu0 0.0
    %297 = vmatpush1.msra.mxu0 0.0
    %298 = vmatprep.subr.mxu0 0.0
    %299 = vmatpush1.msra.mxu0 0.0
    %300 = vmatprep.subr.mxu0 0.0
    %301 = vmatpush1.msra.mxu0 0.0
    %302 = vmatprep.subr.mxu0 0.0
    %303 = vmatpush1.msra.mxu0 0.0
    %304 = vmatprep.subr.mxu0 0.0
    %305 = vmatpush1.msra.mxu0 0.0
    %306 = vmatprep.subr.mxu0 0.0
    %307 = vmatpush1.msra.mxu0 0.0
    %308 = vmatprep.subr.mxu0 0.0
    %309 = vmatpush1.msra.mxu0 0.0
    %310 = vmatprep.subr.mxu0 0.0
    %311 = vmatpush1.msra.mxu0 0.0
    %312 = vmatprep.subr.mxu0 0.0
    %313 = vmatpush1.msra.mxu0 0.0
    %314 = vmatprep.subr.mxu0 0.0
    %315 = vmatpush1.msra.mxu0 0.0
    %316 = vmatprep.subr.mxu0 0.0
    %317 = vmatpush1.msra.mxu0 0.0
    %318 = vmatprep.subr.mxu0 0.0
    %319 = vmatpush1.msra.mxu0 0.0
    %320 = vmatprep.subr.mxu0 0.0
    %321 = vmatpush1.msra.mxu0 0.0
    %322 = vmatprep.subr.mxu0 0.0
    %323 = vmatpush1.msra.mxu0 0.0
    %324 = vmatprep.subr.mxu0 0.0
    %325 = vmatpush1.msra.mxu0 0.0
    %326 = vmatprep.mubr.f32.mxu0 0.0
    %327 = vmatmul.mubr.f32.gmra.mrb[0].mxu0 0.0
    %v328 = vpop.f32.mrb[0].mxu0
    %v329 = vadd.f32 0.0, %v328
    %v330 = vpop.f32.mrb[0].mxu0
    %331 = vdwg.mxu0
    %v333 = vrot.slane %v329, 1
    %v336 = vadd.f32 %v205, %v329
    %v337 = vadd.f32 %v210, %v333
    %v338 = vtanh.pop %v336
    %v339 = vtanh.pop %v337
    %340 = vmatprep.subr.mxu0 0.0
    %341 = vmatpush1.msra.mxu0 %v245
    %342 = vmatprep.subr.mxu0 0.0
    %343 = vmatpush1.msra.mxu0 %v246
    %344 = vmatprep.subr.mxu0 0.0
    %345 = vmatpush1.msra.mxu0 %v247
    %346 = vmatprep.subr.mxu0 0.0
    %347 = vmatpush1.msra.mxu0 %v248
    %348 = vmatprep.subr.mxu0 0.0
    %349 = vmatpush1.msra.mxu0 %v249
    %350 = vmatprep.subr.mxu0 0.0
    %351 = vmatpush1.msra.mxu0 %v250
    %352 = vmatprep.subr.mxu0 0.0
    %353 = vmatpush1.msra.mxu0 %v251
    %354 = vmatprep.subr.mxu0 0.0
    %355 = vmatpush1.msra.mxu0 %v252
    %356 = vmatprep.subr.mxu0 0.0
    %357 = vmatpush1.msra.mxu0 %v253
    %358 = vmatprep.subr.mxu0 0.0
    %359 = vmatpush1.msra.mxu0 %v254
    %360 = vmatprep.subr.mxu0 0.0
    %361 = vmatpush1.msra.mxu0 %v255
    %362 = vmatprep.subr.mxu0 0.0
    %363 = vmatpush1.msra.mxu0 %v256
    %364 = vmatprep.subr.mxu0 0.0
    %365 = vmatpush1.msra.mxu0 %v257
    %366 = vmatprep.subr.mxu0 0.0
    %367 = vmatpush1.msra.mxu0 %v258
    %368 = vmatprep.subr.mxu0 0.0
    %369 = vmatpush1.msra.mxu0 %v259
    %370 = vmatprep.subr.mxu0 0.0
    %371 = vmatpush1.msra.mxu0 %v260
    %372 = vmatprep.subr.mxu0 0.0
    %373 = vmatpush1.msra.mxu0 0.0
    %374 = vmatprep.subr.mxu0 0.0
    %375 = vmatpush1.msra.mxu0 0.0
    %376 = vmatprep.subr.mxu0 0.0
    %377 = vmatpush1.msra.mxu0 0.0
    %378 = vmatprep.subr.mxu0 0.0
    %379 = vmatpush1.msra.mxu0 0.0
    %380 = vmatprep.subr.mxu0 0.0
    %381 = vmatpush1.msra.mxu0 0.0
    %382 = vmatprep.subr.mxu0 0.0
    %383 = vmatpush1.msra.mxu0 0.0
    %384 = vmatprep.subr.mxu0 0.0
    %385 = vmatpush1.msra.mxu0 0.0
    %386 = vmatprep.subr.mxu0 0.0
    %387 = vmatpush1.msra.mxu0 0.0
    %388 = vmatprep.subr.mxu0 0.0
    %389 = vmatpush1.msra.mxu0 0.0
    %390 = vmatprep.subr.mxu0 0.0
    %391 = vmatpush1.msra.mxu0 0.0
    %392 = vmatprep.subr.mxu0 0.0
    %393 = vmatpush1.msra.mxu0 0.0
    %394 = vmatprep.subr.mxu0 0.0
    %395 = vmatpush1.msra.mxu0 0.0
    %396 = vmatprep.subr.mxu0 0.0
    %397 = vmatpush1.msra.mxu0 0.0
    %398 = vmatprep.subr.mxu0 0.0
    %399 = vmatpush1.msra.mxu0 0.0
    %400 = vmatprep.subr.mxu0 0.0
    %401 = vmatpush1.msra.mxu0 0.0
    %402 = vmatprep.subr.mxu0 0.0
    %403 = vmatpush1.msra.mxu0 0.0
    %404 = vmatprep.mubr.f32.mxu0 0.0
    %405 = vmatmul.mubr.f32.gmra.mrb[0].mxu0 0.0
    %v406 = vpop.f32.mrb[0].mxu0
    %v407 = vadd.f32 0.0, %v406
    %v408 = vpop.f32.mrb[0].mxu0
    %409 = vdwg.mxu0
    %v412 = vrot.slane %v339, 7
    %vm413 = vcmask 1041409
    %v414 = vsel %vm413, %v412, %v338
    %416 = vmatprep.subr.mxu0 0.0
    %417 = vmatpush1.msra.mxu0 %v229
    %418 = vmatprep.subr.mxu0 0.0
    %419 = vmatpush1.msra.mxu0 %v230
    %420 = vmatprep.subr.mxu0 0.0
    %421 = vmatpush1.msra.mxu0 %v231
    %422 = vmatprep.subr.mxu0 0.0
    %423 = vmatpush1.msra.mxu0 %v232
    %424 = vmatprep.subr.mxu0 0.0
    %425 = vmatpush1.msra.mxu0 %v233
    %426 = vmatprep.subr.mxu0 0.0
    %427 = vmatpush1.msra.mxu0 %v234
    %428 = vmatprep.subr.mxu0 0.0
    %429 = vmatpush1.msra.mxu0 %v235
    %430 = vmatprep.subr.mxu0 0.0
    %431 = vmatpush1.msra.mxu0 %v236
    %432 = vmatprep.subr.mxu0 0.0
    %433 = vmatpush1.msra.mxu0 %v237
    %434 = vmatprep.subr.mxu0 0.0
    %435 = vmatpush1.msra.mxu0 %v238
    %436 = vmatprep.subr.mxu0 0.0
    %437 = vmatpush1.msra.mxu0 %v239
    %438 = vmatprep.subr.mxu0 0.0
    %439 = vmatpush1.msra.mxu0 %v240
    %440 = vmatprep.subr.mxu0 0.0
    %441 = vmatpush1.msra.mxu0 %v241
    %442 = vmatprep.subr.mxu0 0.0
    %443 = vmatpush1.msra.mxu0 %v242
    %444 = vmatprep.subr.mxu0 0.0
    %445 = vmatpush1.msra.mxu0 %v243
    %446 = vmatprep.subr.mxu0 0.0
    %447 = vmatpush1.msra.mxu0 %v244
    %448 = vmatprep.subr.mxu0 0.0
    %449 = vmatpush1.msra.mxu0 0.0
    %450 = vmatprep.subr.mxu0 0.0
    %451 = vmatpush1.msra.mxu0 0.0
    %452 = vmatprep.subr.mxu0 0.0
    %453 = vmatpush1.msra.mxu0 0.0
    %454 = vmatprep.subr.mxu0 0.0
    %455 = vmatpush1.msra.mxu0 0.0
    %456 = vmatprep.subr.mxu0 0.0
    %457 = vmatpush1.msra.mxu0 0.0
    %458 = vmatprep.subr.mxu0 0.0
    %459 = vmatpush1.msra.mxu0 0.0
    %460 = vmatprep.subr.mxu0 0.0
    %461 = vmatpush1.msra.mxu0 0.0
    %462 = vmatprep.subr.mxu0 0.0
    %463 = vmatpush1.msra.mxu0 0.0
    %464 = vmatprep.subr.mxu0 0.0
    %465 = vmatpush1.msra.mxu0 0.0
    %466 = vmatprep.subr.mxu0 0.0
    %467 = vmatpush1.msra.mxu0 0.0
    %468 = vmatprep.subr.mxu0 0.0
    %469 = vmatpush1.msra.mxu0 0.0
    %470 = vmatprep.subr.mxu0 0.0
    %471 = vmatpush1.msra.mxu0 0.0
    %472 = vmatprep.subr.mxu0 0.0
    %473 = vmatpush1.msra.mxu0 0.0
    %474 = vmatprep.subr.mxu0 0.0
    %475 = vmatpush1.msra.mxu0 0.0
    %476 = vmatprep.subr.mxu0 0.0
    %477 = vmatpush1.msra.mxu0 0.0
    %478 = vmatprep.subr.mxu0 0.0
    %479 = vmatpush1.msra.mxu0 0.0
    %480 = vmatprep.mubr.f32.mxu0 0.0
    %481 = vmatmul.mubr.f32.gmra.mrb[0].mxu0 %v414
    %v482 = vpop.f32.mrb[0].mxu0
    %v483 = vadd.f32 %v407, %v482
    %v484 = vpop.f32.mrb[0].mxu0
    %485 = vdwg.mxu0
    %v487 = vlaneseq
    %v488 = vshrl.u32 %v487, 7
    %v489 = vsub.s32 0, %v488
    %v490 = vrot.slane %v261, %v489
    %v492 = vadd.f32 %v483, %v490
    %v493 = vtanh.pop %v492
    %vm494 = vcmask 1041408
    %v495 = vsel %vm494, %v493, -inf
    %v496 = vrot.slane %v495, 4
    %v497 = vmax.f32 %v495, %v496
    %v498 = vrot.slane %v497, 2
    %v499 = vmax.f32 %v497, %v498
    %v500 = vrot.slane %v499, 1
    %v501 = vmax.f32 %v499, %v500
    %v502 = vsub.f32 %v493, %v501
    %v503 = vmul.f32 %v502, 1.442695
    %v504 = vpow.pop %v503
    %v505 = vsel %vm494, %v504, 0.0
    %v506 = vrot.slane %v505, 4
    %v507 = vadd.f32 %v505, %v506
    %v508 = vrot.slane %v507, 2
    %v509 = vadd.f32 %v507, %v508
    %v510 = vrot.slane %v509, 1
    %v511 = vadd.f32 %v509, %v510
    %v512 = vrcp.pop %v511
    %v513 = vmul.f32 %v504, %v512
    %v516 = vunpack.c.l.s4 1966171168
    %v517 = vunpack.c.0.s8 %v516
    %v518 = vlaneseq
    %v519 = vshrl.u32 %v518, 7
    %v520 = vsub.s32 %v517, %v519
    %v521 = vrot.slane %v513, %v520
    %v522 = vcombine.high %v521, %v521
    %v524 = vunpack.c.l.s4 1966171168
    %v525 = vunpack.c.0.s8 %v524
    %v526 = vlaneseq
    %v527 = vshrl.u32 %v526, 7
    %v528 = vsub.s32 %v525, %v527
    %v529 = vrot.slane %v521, %v528
    %v531 = vunpack.c.l.s4 1966171168
    %v532 = vunpack.c.0.s8 %v531
    %v533 = vlaneseq
    %v534 = vshrl.u32 %v533, 7
    %v535 = vsub.s32 %v532, %v534
    %v536 = vrot.slane %v522, %v535
    %539 = vst [vmem:[#allocation11] sm:$0x1] %v529
    %540 = vst [vmem:[#allocation11 + $0x8] sm:$0x1] %v536
    %541 = vmatprep.subr.mxu0 0.0
    %542 = vmatpush1.msra.mxu0 %v213
    %543 = vmatprep.subr.mxu0 0.0
    %544 = vmatpush1.msra.mxu0 %v214
    %545 = vmatprep.subr.mxu0 0.0
    %546 = vmatpush1.msra.mxu0 %v215
    %547 = vmatprep.subr.mxu0 0.0
    %548 = vmatpush1.msra.mxu0 %v216
    %549 = vmatprep.subr.mxu0 0.0
    %550 = vmatpush1.msra.mxu0 %v217
    %551 = vmatprep.subr.mxu0 0.0
    %552 = vmatpush1.msra.mxu0 %v218
    %553 = vmatprep.subr.mxu0 0.0
    %554 = vmatpush1.msra.mxu0 %v219
    %555 = vmatprep.subr.mxu0 0.0
    %556 = vmatpush1.msra.mxu0 %v220
    %557 = vmatprep.subr.mxu0 0.0
    %558 = vmatpush1.msra.mxu0 %v221
    %559 = vmatprep.subr.mxu0 0.0
    %560 = vmatpush1.msra.mxu0 %v222
    %561 = vmatprep.subr.mxu0 0.0
    %562 = vmatpush1.msra.mxu0 %v223
    %563 = vmatprep.subr.mxu0 0.0
    %564 = vmatpush1.msra.mxu0 %v224
    %565 = vmatprep.subr.mxu0 0.0
    %566 = vmatpush1.msra.mxu0 %v225
    %567 = vmatprep.subr.mxu0 0.0
    %568 = vmatpush1.msra.mxu0 %v226
    %569 = vmatprep.subr.mxu0 0.0
    %570 = vmatpush1.msra.mxu0 %v227
    %571 = vmatprep.subr.mxu0 0.0
    %572 = vmatpush1.msra.mxu0 %v228
    %573 = vmatprep.subr.mxu0 0.0
    %574 = vmatpush1.msra.mxu0 0.0
    %575 = vmatprep.subr.mxu0 0.0
    %576 = vmatpush1.msra.mxu0 0.0
    %577 = vmatprep.subr.mxu0 0.0
    %578 = vmatpush1.msra.mxu0 0.0
    %579 = vmatprep.subr.mxu0 0.0
    %580 = vmatpush1.msra.mxu0 0.0
    %581 = vmatprep.subr.mxu0 0.0
    %582 = vmatpush1.msra.mxu0 0.0
    %583 = vmatprep.subr.mxu0 0.0
    %584 = vmatpush1.msra.mxu0 0.0
    %585 = vmatprep.subr.mxu0 0.0
    %586 = vmatpush1.msra.mxu0 0.0
    %587 = vmatprep.subr.mxu0 0.0
    %588 = vmatpush1.msra.mxu0 0.0
    %589 = vmatprep.subr.mxu0 0.0
    %590 = vmatpush1.msra.mxu0 0.0
    %591 = vmatprep.subr.mxu0 0.0
    %592 = vmatpush1.msra.mxu0 0.0
    %593 = vmatprep.subr.mxu0 0.0
    %594 = vmatpush1.msra.mxu0 0.0
    %595 = vmatprep.subr.mxu0 0.0
    %596 = vmatpush1.msra.mxu0 0.0
    %597 = vmatprep.subr.mxu0 0.0
    %598 = vmatpush1.msra.mxu0 0.0
    %599 = vmatprep.subr.mxu0 0.0
    %600 = vmatpush1.msra.mxu0 0.0
    %601 = vmatprep.subr.mxu0 0.0
    %602 = vmatpush1.msra.mxu0 0.0
    %603 = vmatprep.subr.mxu0 0.0
    %604 = vmatpush1.msra.mxu0 0.0
    %605 = vmatprep.mubr.f32.mxu0 0.0
    %606 = vmatmul.mubr.f32.gmra.mrb[0].mxu0 %v414
    %v607 = vpop.f32.mrb[0].mxu0
    %v608 = vadd.f32 0.0, %v607
    %v609 = vpop.f32.mrb[0].mxu0
    %610 = vdwg.mxu0
    %v612 = vrot.slane %v608, 7
    %v615 = vadd.f32 %v205, %v612
    %v616 = vadd.f32 %v210, %v608
    %v617 = vtanh.pop %v615
    %v618 = vtanh.pop %v616
    %619 = vmatprep.subr.mxu0 0.0
    %620 = vmatpush1.msra.mxu0 %v245
    %621 = vmatprep.subr.mxu0 0.0
    %622 = vmatpush1.msra.mxu0 %v246
    %623 = vmatprep.subr.mxu0 0.0
    %624 = vmatpush1.msra.mxu0 %v247
    %625 = vmatprep.subr.mxu0 0.0
    %626 = vmatpush1.msra.mxu0 %v248
    %627 = vmatprep.subr.mxu0 0.0
    %628 = vmatpush1.msra.mxu0 %v249
    %629 = vmatprep.subr.mxu0 0.0
    %630 = vmatpush1.msra.mxu0 %v250
    %631 = vmatprep.subr.mxu0 0.0
    %632 = vmatpush1.msra.mxu0 %v251
    %633 = vmatprep.subr.mxu0 0.0
    %634 = vmatpush1.msra.mxu0 %v252
    %635 = vmatprep.subr.mxu0 0.0
    %636 = vmatpush1.msra.mxu0 %v253
    %637 = vmatprep.subr.mxu0 0.0
    %638 = vmatpush1.msra.mxu0 %v254
    %639 = vmatprep.subr.mxu0 0.0
    %640 = vmatpush1.msra.mxu0 %v255
    %641 = vmatprep.subr.mxu0 0.0
    %642 = vmatpush1.msra.mxu0 %v256
    %643 = vmatprep.subr.mxu0 0.0
    %644 = vmatpush1.msra.mxu0 %v257
    %645 = vmatprep.subr.mxu0 0.0
    %646 = vmatpush1.msra.mxu0 %v258
    %647 = vmatprep.subr.mxu0 0.0
    %648 = vmatpush1.msra.mxu0 %v259
    %649 = vmatprep.subr.mxu0 0.0
    %650 = vmatpush1.msra.mxu0 %v260
    %651 = vmatprep.subr.mxu0 0.0
    %652 = vmatpush1.msra.mxu0 0.0
    %653 = vmatprep.subr.mxu0 0.0
    %654 = vmatpush1.msra.mxu0 0.0
    %655 = vmatprep.subr.mxu0 0.0
    %656 = vmatpush1.msra.mxu0 0.0
    %657 = vmatprep.subr.mxu0 0.0
    %658 = vmatpush1.msra.mxu0 0.0
    %659 = vmatprep.subr.mxu0 0.0
    %660 = vmatpush1.msra.mxu0 0.0
    %661 = vmatprep.subr.mxu0 0.0
    %662 = vmatpush1.msra.mxu0 0.0
    %663 = vmatprep.subr.mxu0 0.0
    %664 = vmatpush1.msra.mxu0 0.0
    %665 = vmatprep.subr.mxu0 0.0
    %666 = vmatpush1.msra.mxu0 0.0
    %667 = vmatprep.subr.mxu0 0.0
    %668 = vmatpush1.msra.mxu0 0.0
    %669 = vmatprep.subr.mxu0 0.0
    %670 = vmatpush1.msra.mxu0 0.0
    %671 = vmatprep.subr.mxu0 0.0
    %672 = vmatpush1.msra.mxu0 0.0
    %673 = vmatprep.subr.mxu0 0.0
    %674 = vmatpush1.msra.mxu0 0.0
    %675 = vmatprep.subr.mxu0 0.0
    %676 = vmatpush1.msra.mxu0 0.0
    %677 = vmatprep.subr.mxu0 0.0
    %678 = vmatpush1.msra.mxu0 0.0
    %679 = vmatprep.subr.mxu0 0.0
    %680 = vmatpush1.msra.mxu0 0.0
    %681 = vmatprep.subr.mxu0 0.0
    %682 = vmatpush1.msra.mxu0 0.0
    %683 = vmatprep.mubr.f32.mxu0 0.0
    %684 = vmatmul.mubr.f32.gmra.mrb[0].mxu0 %v493
    %v685 = vpop.f32.mrb[0].mxu0
    %v686 = vadd.f32 0.0, %v685
    %v687 = vpop.f32.mrb[0].mxu0
    %688 = vdwg.mxu0
    %v691 = vrot.slane %v617, 1
    %v692 = vsel %vm413, %v618, %v691
    %694 = vmatprep.subr.mxu0 0.0
    %695 = vmatpush1.msra.mxu0 %v229
    %696 = vmatprep.subr.mxu0 0.0
    %697 = vmatpush1.msra.mxu0 %v230
    %698 = vmatprep.subr.mxu0 0.0
    %699 = vmatpush1.msra.mxu0 %v231
    %700 = vmatprep.subr.mxu0 0.0
    %701 = vmatpush1.msra.mxu0 %v232
    %702 = vmatprep.subr.mxu0 0.0
    %703 = vmatpush1.msra.mxu0 %v233
    %704 = vmatprep.subr.mxu0 0.0
    %705 = vmatpush1.msra.mxu0 %v234
    %706 = vmatprep.subr.mxu0 0.0
    %707 = vmatpush1.msra.mxu0 %v235
    %708 = vmatprep.subr.mxu0 0.0
    %709 = vmatpush1.msra.mxu0 %v236
    %710 = vmatprep.subr.mxu0 0.0
    %711 = vmatpush1.msra.mxu0 %v237
    %712 = vmatprep.subr.mxu0 0.0
    %713 = vmatpush1.msra.mxu0 %v238
    %714 = vmatprep.subr.mxu0 0.0
    %715 = vmatpush1.msra.mxu0 %v239
    %716 = vmatprep.subr.mxu0 0.0
    %717 = vmatpush1.msra.mxu0 %v240
    %718 = vmatprep.subr.mxu0 0.0
    %719 = vmatpush1.msra.mxu0 %v241
    %720 = vmatprep.subr.mxu0 0.0
    %721 = vmatpush1.msra.mxu0 %v242
    %722 = vmatprep.subr.mxu0 0.0
    %723 = vmatpush1.msra.mxu0 %v243
    %724 = vmatprep.subr.mxu0 0.0
    %725 = vmatpush1.msra.mxu0 %v244
    %726 = vmatprep.subr.mxu0 0.0
    %727 = vmatpush1.msra.mxu0 0.0
    %728 = vmatprep.subr.mxu0 0.0
    %729 = vmatpush1.msra.mxu0 0.0
    %730 = vmatprep.subr.mxu0 0.0
    %731 = vmatpush1.msra.mxu0 0.0
    %732 = vmatprep.subr.mxu0 0.0
    %733 = vmatpush1.msra.mxu0 0.0
    %734 = vmatprep.subr.mxu0 0.0
    %735 = vmatpush1.msra.mxu0 0.0
    %736 = vmatprep.subr.mxu0 0.0
    %737 = vmatpush1.msra.mxu0 0.0
    %738 = vmatprep.subr.mxu0 0.0
    %739 = vmatpush1.msra.mxu0 0.0
    %740 = vmatprep.subr.mxu0 0.0
    %741 = vmatpush1.msra.mxu0 0.0
    %742 = vmatprep.subr.mxu0 0.0
    %743 = vmatpush1.msra.mxu0 0.0
    %744 = vmatprep.subr.mxu0 0.0
    %745 = vmatpush1.msra.mxu0 0.0
    %746 = vmatprep.subr.mxu0 0.0
    %747 = vmatpush1.msra.mxu0 0.0
    %748 = vmatprep.subr.mxu0 0.0
    %749 = vmatpush1.msra.mxu0 0.0
    %750 = vmatprep.subr.mxu0 0.0
    %751 = vmatpush1.msra.mxu0 0.0
    %752 = vmatprep.subr.mxu0 0.0
    %753 = vmatpush1.msra.mxu0 0.0
    %754 = vmatprep.subr.mxu0 0.0
    %755 = vmatpush1.msra.mxu0 0.0
    %756 = vmatprep.subr.mxu0 0.0
    %757 = vmatpush1.msra.mxu0 0.0
    %758 = vmatprep.mubr.f32.mxu0 0.0
    %759 = vmatmul.mubr.f32.gmra.mrb[0].mxu0 %v692
    %v760 = vpop.f32.mrb[0].mxu0
    %v761 = vadd.f32 %v686, %v760
    %v762 = vpop.f32.mrb[0].mxu0
    %763 = vdwg.mxu0
    %v764 = vadd.f32 %v761, %v490
    %v765 = vtanh.pop %v764
    %v766 = vsel %vm494, %v765, -inf
    %v767 = vrot.slane %v766, 4
    %v768 = vmax.f32 %v766, %v767
    %v769 = vrot.slane %v768, 2
    %v770 = vmax.f32 %v768, %v769
    %v771 = vrot.slane %v770, 1
    %v772 = vmax.f32 %v770, %v771
    %v773 = vsub.f32 %v765, %v772
    %v774 = vmul.f32 %v773, 1.442695
    %v775 = vpow.pop %v774
    %v776 = vsel %vm494, %v775, 0.0
    %v777 = vrot.slane %v776, 4
    %v778 = vadd.f32 %v776, %v777
    %v779 = vrot.slane %v778, 2
    %v780 = vadd.f32 %v778, %v779
    %v781 = vrot.slane %v780, 1
    %v782 = vadd.f32 %v780, %v781
    %v783 = vrcp.pop %v782
    %v784 = vmul.f32 %v775, %v783
    %v787 = vunpack.c.l.s4 1966171168
    %v788 = vunpack.c.0.s8 %v787
    %v789 = vlaneseq
    %v790 = vshrl.u32 %v789, 7
    %v791 = vsub.s32 %v788, %v790
    %v792 = vrot.slane %v784, %v791
    %v793 = vcombine.high %v792, %v792
    %v795 = vunpack.c.l.s4 1966171168
    %v796 = vunpack.c.0.s8 %v795
    %v797 = vlaneseq
    %v798 = vshrl.u32 %v797, 7
    %v799 = vsub.s32 %v796, %v798
    %v800 = vrot.slane %v792, %v799
    %v802 = vunpack.c.l.s4 1966171168
    %v803 = vunpack.c.0.s8 %v802
    %v804 = vlaneseq
    %v805 = vshrl.u32 %v804, 7
    %v806 = vsub.s32 %v803, %v805
    %v807 = vrot.slane %v793, %v806
    %810 = vst [vmem:[#allocation11 + $0x1] sm:$0x1] %v800
    %811 = vst [vmem:[#allocation11 + $0x9] sm:$0x1] %v807
    %812 = vmatprep.subr.mxu0 0.0
    %813 = vmatpush1.msra.mxu0 %v213
    %814 = vmatprep.subr.mxu0 0.0
    %815 = vmatpush1.msra.mxu0 %v214
    %816 = vmatprep.subr.mxu0 0.0
    %817 = vmatpush1.msra.mxu0 %v215
    %818 = vmatprep.subr.mxu0 0.0
    %819 = vmatpush1.msra.mxu0 %v216
    %820 = vmatprep.subr.mxu0 0.0
    %821 = vmatpush1.msra.mxu0 %v217
    %822 = vmatprep.subr.mxu0 0.0
    %823 = vmatpush1.msra.mxu0 %v218
    %824 = vmatprep.subr.mxu0 0.0
    %825 = vmatpush1.msra.mxu0 %v219
    %826 = vmatprep.subr.mxu0 0.0
    %827 = vmatpush1.msra.mxu0 %v220
    %828 = vmatprep.subr.mxu0 0.0
    %829 = vmatpush1.msra.mxu0 %v221
    %830 = vmatprep.subr.mxu0 0.0
    %831 = vmatpush1.msra.mxu0 %v222
    %832 = vmatprep.subr.mxu0 0.0
    %833 = vmatpush1.msra.mxu0 %v223
    %834 = vmatprep.subr.mxu0 0.0
    %835 = vmatpush1.msra.mxu0 %v224
    %836 = vmatprep.subr.mxu0 0.0
    %837 = vmatpush1.msra.mxu0 %v225
    %838 = vmatprep.subr.mxu0 0.0
    %839 = vmatpush1.msra.mxu0 %v226
    %840 = vmatprep.subr.mxu0 0.0
    %841 = vmatpush1.msra.mxu0 %v227
    %842 = vmatprep.subr.mxu0 0.0
    %843 = vmatpush1.msra.mxu0 %v228
    %844 = vmatprep.subr.mxu0 0.0
    %845 = vmatpush1.msra.mxu0 0.0
    %846 = vmatprep.subr.mxu0 0.0
    %847 = vmatpush1.msra.mxu0 0.0
    %848 = vmatprep.subr.mxu0 0.0
    %849 = vmatpush1.msra.mxu0 0.0
    %850 = vmatprep.subr.mxu0 0.0
    %851 = vmatpush1.msra.mxu0 0.0
    %852 = vmatprep.subr.mxu0 0.0
    %853 = vmatpush1.msra.mxu0 0.0
    %854 = vmatprep.subr.mxu0 0.0
    %855 = vmatpush1.msra.mxu0 0.0
    %856 = vmatprep.subr.mxu0 0.0
    %857 = vmatpush1.msra.mxu0 0.0
    %858 = vmatprep.subr.mxu0 0.0
    %859 = vmatpush1.msra.mxu0 0.0
    %860 = vmatprep.subr.mxu0 0.0
    %861 = vmatpush1.msra.mxu0 0.0
    %862 = vmatprep.subr.mxu0 0.0
    %863 = vmatpush1.msra.mxu0 0.0
    %864 = vmatprep.subr.mxu0 0.0
    %865 = vmatpush1.msra.mxu0 0.0
    %866 = vmatprep.subr.mxu0 0.0
    %867 = vmatpush1.msra.mxu0 0.0
    %868 = vmatprep.subr.mxu0 0.0
    %869 = vmatpush1.msra.mxu0 0.0
    %870 = vmatprep.subr.mxu0 0.0
    %871 = vmatpush1.msra.mxu0 0.0
    %872 = vmatprep.subr.mxu0 0.0
    %873 = vmatpush1.msra.mxu0 0.0
    %874 = vmatprep.subr.mxu0 0.0
    %875 = vmatpush1.msra.mxu0 0.0
    %876 = vmatprep.mubr.f32.mxu0 0.0
    %877 = vmatmul.mubr.f32.gmra.mrb[0].mxu0 %v692
    %v878 = vpop.f32.mrb[0].mxu0
    %v879 = vadd.f32 0.0, %v878
    %v880 = vpop.f32.mrb[0].mxu0
    %881 = vdwg.mxu0
    %v883 = vrot.slane %v879, 6
    %v884 = vrot.slane %v879, 7
    %v887 = vadd.f32 %v205, %v883
    %v888 = vadd.f32 %v210, %v884
    %v889 = vtanh.pop %v887
    %v890 = vtanh.pop %v888
    %891 = vmatprep.subr.mxu0 0.0
    %892 = vmatpush1.msra.mxu0 %v245
    %893 = vmatprep.subr.mxu0 0.0
    %894 = vmatpush1.msra.mxu0 %v246
    %895 = vmatprep.subr.mxu0 0.0
    %896 = vmatpush1.msra.mxu0 %v247
    %897 = vmatprep.subr.mxu0 0.0
    %898 = vmatpush1.msra.mxu0 %v248
    %899 = vmatprep.subr.mxu0 0.0
    %900 = vmatpush1.msra.mxu0 %v249
    %901 = vmatprep.subr.mxu0 0.0
    %902 = vmatpush1.msra.mxu0 %v250
    %903 = vmatprep.subr.mxu0 0.0
    %904 = vmatpush1.msra.mxu0 %v251
    %905 = vmatprep.subr.mxu0 0.0
    %906 = vmatpush1.msra.mxu0 %v252
    %907 = vmatprep.subr.mxu0 0.0
    %908 = vmatpush1.msra.mxu0 %v253
    %909 = vmatprep.subr.mxu0 0.0
    %910 = vmatpush1.msra.mxu0 %v254
    %911 = vmatprep.subr.mxu0 0.0
    %912 = vmatpush1.msra.mxu0 %v255
    %913 = vmatprep.subr.mxu0 0.0
    %914 = vmatpush1.msra.mxu0 %v256
    %915 = vmatprep.subr.mxu0 0.0
    %916 = vmatpush1.msra.mxu0 %v257
    %917 = vmatprep.subr.mxu0 0.0
    %918 = vmatpush1.msra.mxu0 %v258
    %919 = vmatprep.subr.mxu0 0.0
    %920 = vmatpush1.msra.mxu0 %v259
    %921 = vmatprep.subr.mxu0 0.0
    %922 = vmatpush1.msra.mxu0 %v260
    %923 = vmatprep.subr.mxu0 0.0
    %924 = vmatpush1.msra.mxu0 0.0
    %925 = vmatprep.subr.mxu0 0.0
    %926 = vmatpush1.msra.mxu0 0.0
    %927 = vmatprep.subr.mxu0 0.0
    %928 = vmatpush1.msra.mxu0 0.0
    %929 = vmatprep.subr.mxu0 0.0
    %930 = vmatpush1.msra.mxu0 0.0
    %931 = vmatprep.subr.mxu0 0.0
    %932 = vmatpush1.msra.mxu0 0.0
    %933 = vmatprep.subr.mxu0 0.0
    %934 = vmatpush1.msra.mxu0 0.0
    %935 = vmatprep.subr.mxu0 0.0
    %936 = vmatpush1.msra.mxu0 0.0
    %937 = vmatprep.subr.mxu0 0.0
    %938 = vmatpush1.msra.mxu0 0.0
    %939 = vmatprep.subr.mxu0 0.0
    %940 = vmatpush1.msra.mxu0 0.0
    %941 = vmatprep.subr.mxu0 0.0
    %942 = vmatpush1.msra.mxu0 0.0
    %943 = vmatprep.subr.mxu0 0.0
    %944 = vmatpush1.msra.mxu0 0.0
    %945 = vmatprep.subr.mxu0 0.0
    %946 = vmatpush1.msra.mxu0 0.0
    %947 = vmatprep.subr.mxu0 0.0
    %948 = vmatpush1.msra.mxu0 0.0
    %949 = vmatprep.subr.mxu0 0.0
    %950 = vmatpush1.msra.mxu0 0.0
    %951 = vmatprep.subr.mxu0 0.0
    %952 = vmatpush1.msra.mxu0 0.0
    %953 = vmatprep.subr.mxu0 0.0
    %954 = vmatpush1.msra.mxu0 0.0
    %955 = vmatprep.mubr.f32.mxu0 0.0
    %956 = vmatmul.mubr.f32.gmra.mrb[0].mxu0 %v765
    %v957 = vpop.f32.mrb[0].mxu0
    %v958 = vadd.f32 0.0, %v957
    %v959 = vpop.f32.mrb[0].mxu0
    %960 = vdwg.mxu0
    %v963 = vrot.slane %v889, 2
    %v964 = vrot.slane %v890, 1
    %v965 = vsel %vm413, %v964, %v963
    %967 = vmatprep.subr.mxu0 0.0
    %968 = vmatpush1.msra.mxu0 %v229
    %969 = vmatprep.subr.mxu0 0.0
    %970 = vmatpush1.msra.mxu0 %v230
    %971 = vmatprep.subr.mxu0 0.0
    %972 = vmatpush1.msra.mxu0 %v231
    %973 = vmatprep.subr.mxu0 0.0
    %974 = vmatpush1.msra.mxu0 %v232
    %975 = vmatprep.subr.mxu0 0.0
    %976 = vmatpush1.msra.mxu0 %v233
    %977 = vmatprep.subr.mxu0 0.0
    %978 = vmatpush1.msra.mxu0 %v234
    %979 = vmatprep.subr.mxu0 0.0
    %980 = vmatpush1.msra.mxu0 %v235
    %981 = vmatprep.subr.mxu0 0.0
    %982 = vmatpush1.msra.mxu0 %v236
    %983 = vmatprep.subr.mxu0 0.0
    %984 = vmatpush1.msra.mxu0 %v237
    %985 = vmatprep.subr.mxu0 0.0
    %986 = vmatpush1.msra.mxu0 %v238
    %987 = vmatprep.subr.mxu0 0.0
    %988 = vmatpush1.msra.mxu0 %v239
    %989 = vmatprep.subr.mxu0 0.0
    %990 = vmatpush1.msra.mxu0 %v240
    %991 = vmatprep.subr.mxu0 0.0
    %992 = vmatpush1.msra.mxu0 %v241
    %993 = vmatprep.subr.mxu0 0.0
    %994 = vmatpush1.msra.mxu0 %v242
    %995 = vmatprep.subr.mxu0 0.0
    %996 = vmatpush1.msra.mxu0 %v243
    %997 = vmatprep.subr.mxu0 0.0
    %998 = vmatpush1.msra.mxu0 %v244
    %999 = vmatprep.subr.mxu0 0.0
    %1000 = vmatpush1.msra.mxu0 0.0
    %1001 = vmatprep.subr.mxu0 0.0
    %1002 = vmatpush1.msra.mxu0 0.0
    %1003 = vmatprep.subr.mxu0 0.0
    %1004 = vmatpush1.msra.mxu0 0.0
    %1005 = vmatprep.subr.mxu0 0.0
    %1006 = vmatpush1.msra.mxu0 0.0
    %1007 = vmatprep.subr.mxu0 0.0
    %1008 = vmatpush1.msra.mxu0 0.0
    %1009 = vmatprep.subr.mxu0 0.0
    %1010 = vmatpush1.msra.mxu0 0.0
    %1011 = vmatprep.subr.mxu0 0.0
    %1012 = vmatpush1.msra.mxu0 0.0
    %1013 = vmatprep.subr.mxu0 0.0
    %1014 = vmatpush1.msra.mxu0 0.0
    %1015 = vmatprep.subr.mxu0 0.0
    %1016 = vmatpush1.msra.mxu0 0.0
    %1017 = vmatprep.subr.mxu0 0.0
    %1018 = vmatpush1.msra.mxu0 0.0
    %1019 = vmatprep.subr.mxu0 0.0
    %1020 = vmatpush1.msra.mxu0 0.0
    %1021 = vmatprep.subr.mxu0 0.0
    %1022 = vmatpush1.msra.mxu0 0.0
    %1023 = vmatprep.subr.mxu0 0.0
    %1024 = vmatpush1.msra.mxu0 0.0
    %1025 = vmatprep.subr.mxu0 0.0
    %1026 = vmatpush1.msra.mxu0 0.0
    %1027 = vmatprep.subr.mxu0 0.0
    %1028 = vmatpush1.msra.mxu0 0.0
    %1029 = vmatprep.subr.mxu0 0.0
    %1030 = vmatpush1.msra.mxu0 0.0
    %1031 = vmatprep.mubr.f32.mxu0 0.0
    %1032 = vmatmul.mubr.f32.gmra.mrb[0].mxu0 %v965
    %v1033 = vpop.f32.mrb[0].mxu0
    %v1034 = vadd.f32 %v958, %v1033
    %v1035 = vpop.f32.mrb[0].mxu0
    %1036 = vdwg.mxu0
    %v1037 = vadd.f32 %v1034, %v490
    %v1038 = vtanh.pop %v1037
    %v1039 = vsel %vm494, %v1038, -inf
    %v1040 = vrot.slane %v1039, 4
    %v1041 = vmax.f32 %v1039, %v1040
    %v1042 = vrot.slane %v1041, 2
    %v1043 = vmax.f32 %v1041, %v1042
    %v1044 = vrot.slane %v1043, 1
    %v1045 = vmax.f32 %v1043, %v1044
    %v1046 = vsub.f32 %v1038, %v1045
    %v1047 = vmul.f32 %v1046, 1.442695
    %v1048 = vpow.pop %v1047
    %v1049 = vsel %vm494, %v1048, 0.0
    %v1050 = vrot.slane %v1049, 4
    %v1051 = vadd.f32 %v1049, %v1050
    %v1052 = vrot.slane %v1051, 2
    %v1053 = vadd.f32 %v1051, %v1052
    %v1054 = vrot.slane %v1053, 1
    %v1055 = vadd.f32 %v1053, %v1054
    %v1056 = vrcp.pop %v1055
    %v1057 = vmul.f32 %v1048, %v1056
    %v1060 = vunpack.c.l.s4 1966171168
    %v1061 = vunpack.c.0.s8 %v1060
    %v1062 = vlaneseq
    %v1063 = vshrl.u32 %v1062, 7
    %v1064 = vsub.s32 %v1061, %v1063
    %v1065 = vrot.slane %v1057, %v1064
    %v1066 = vcombine.high %v1065, %v1065
    %v1068 = vunpack.c.l.s4 1966171168
    %v1069 = vunpack.c.0.s8 %v1068
    %v1070 = vlaneseq
    %v1071 = vshrl.u32 %v1070, 7
    %v1072 = vsub.s32 %v1069, %v1071
    %v1073 = vrot.slane %v1065, %v1072
    %v1075 = vunpack.c.l.s4 1966171168
    %v1076 = vunpack.c.0.s8 %v1075
    %v1077 = vlaneseq
    %v1078 = vshrl.u32 %v1077, 7
    %v1079 = vsub.s32 %v1076, %v1078
    %v1080 = vrot.slane %v1066, %v1079
    %1083 = vst [vmem:[#allocation11 + $0x2] sm:$0x1] %v1073
    %1084 = vst [vmem:[#allocation11 + $0xa] sm:$0x1] %v1080
    %1085 = vmatprep.subr.mxu0 0.0
    %1086 = vmatpush1.msra.mxu0 %v213
    %1087 = vmatprep.subr.mxu0 0.0
    %1088 = vmatpush1.msra.mxu0 %v214
    %1089 = vmatprep.subr.mxu0 0.0
    %1090 = vmatpush1.msra.mxu0 %v215
    %1091 = vmatprep.subr.mxu0 0.0
    %1092 = vmatpush1.msra.mxu0 %v216
    %1093 = vmatprep.subr.mxu0 0.0
    %1094 = vmatpush1.msra.mxu0 %v217
    %1095 = vmatprep.subr.mxu0 0.0
    %1096 = vmatpush1.msra.mxu0 %v218
    %1097 = vmatprep.subr.mxu0 0.0
    %1098 = vmatpush1.msra.mxu0 %v219
    %1099 = vmatprep.subr.mxu0 0.0
    %1100 = vmatpush1.msra.mxu0 %v220
    %1101 = vmatprep.subr.mxu0 0.0
    %1102 = vmatpush1.msra.mxu0 %v221
    %1103 = vmatprep.subr.mxu0 0.0
    %1104 = vmatpush1.msra.mxu0 %v222
    %1105 = vmatprep.subr.mxu0 0.0
    %1106 = vmatpush1.msra.mxu0 %v223
    %1107 = vmatprep.subr.mxu0 0.0
    %1108 = vmatpush1.msra.mxu0 %v224
    %1109 = vmatprep.subr.mxu0 0.0
    %1110 = vmatpush1.msra.mxu0 %v225
    %1111 = vmatprep.subr.mxu0 0.0
    %1112 = vmatpush1.msra.mxu0 %v226
    %1113 = vmatprep.subr.mxu0 0.0
    %1114 = vmatpush1.msra.mxu0 %v227
    %1115 = vmatprep.subr.mxu0 0.0
    %1116 = vmatpush1.msra.mxu0 %v228
    %1117 = vmatprep.subr.mxu0 0.0
    %1118 = vmatpush1.msra.mxu0 0.0
    %1119 = vmatprep.subr.mxu0 0.0
    %1120 = vmatpush1.msra.mxu0 0.0
    %1121 = vmatprep.subr.mxu0 0.0
    %1122 = vmatpush1.msra.mxu0 0.0
    %1123 = vmatprep.subr.mxu0 0.0
    %1124 = vmatpush1.msra.mxu0 0.0
    %1125 = vmatprep.subr.mxu0 0.0
    %1126 = vmatpush1.msra.mxu0 0.0
    %1127 = vmatprep.subr.mxu0 0.0
    %1128 = vmatpush1.msra.mxu0 0.0
    %1129 = vmatprep.subr.mxu0 0.0
    %1130 = vmatpush1.msra.mxu0 0.0
    %1131 = vmatprep.subr.mxu0 0.0
    %1132 = vmatpush1.msra.mxu0 0.0
    %1133 = vmatprep.subr.mxu0 0.0
    %1134 = vmatpush1.msra.mxu0 0.0
    %1135 = vmatprep.subr.mxu0 0.0
    %1136 = vmatpush1.msra.mxu0 0.0
    %1137 = vmatprep.subr.mxu0 0.0
    %1138 = vmatpush1.msra.mxu0 0.0
    %1139 = vmatprep.subr.mxu0 0.0
    %1140 = vmatpush1.msra.mxu0 0.0
    %1141 = vmatprep.subr.mxu0 0.0
    %1142 = vmatpush1.msra.mxu0 0.0
    %1143 = vmatprep.subr.mxu0 0.0
    %1144 = vmatpush1.msra.mxu0 0.0
    %1145 = vmatprep.subr.mxu0 0.0
    %1146 = vmatpush1.msra.mxu0 0.0
    %1147 = vmatprep.subr.mxu0 0.0
    %1148 = vmatpush1.msra.mxu0 0.0
    %1149 = vmatprep.mubr.f32.mxu0 0.0
    %1150 = vmatmul.mubr.f32.gmra.mrb[0].mxu0 %v965
    %v1151 = vpop.f32.mrb[0].mxu0
    %v1152 = vadd.f32 0.0, %v1151
    %v1153 = vpop.f32.mrb[0].mxu0
    %1154 = vdwg.mxu0
    %v1156 = vrot.slane %v1152, 5
    %v1157 = vrot.slane %v1152, 6
    %v1160 = vadd.f32 %v205, %v1156
    %v1161 = vadd.f32 %v210, %v1157
    %v1162 = vtanh.pop %v1160
    %v1163 = vtanh.pop %v1161
    %1164 = vmatprep.subr.mxu0 0.0
    %1165 = vmatpush1.msra.mxu0 %v245
    %1166 = vmatprep.subr.mxu0 0.0
    %1167 = vmatpush1.msra.mxu0 %v246
    %1168 = vmatprep.subr.mxu0 0.0
    %1169 = vmatpush1.msra.mxu0 %v247
    %1170 = vmatprep.subr.mxu0 0.0
    %1171 = vmatpush1.msra.mxu0 %v248
    %1172 = vmatprep.subr.mxu0 0.0
    %1173 = vmatpush1.msra.mxu0 %v249
    %1174 = vmatprep.subr.mxu0 0.0
    %1175 = vmatpush1.msra.mxu0 %v250
    %1176 = vmatprep.subr.mxu0 0.0
    %1177 = vmatpush1.msra.mxu0 %v251
    %1178 = vmatprep.subr.mxu0 0.0
    %1179 = vmatpush1.msra.mxu0 %v252
    %1180 = vmatprep.subr.mxu0 0.0
    %1181 = vmatpush1.msra.mxu0 %v253
    %1182 = vmatprep.subr.mxu0 0.0
    %1183 = vmatpush1.msra.mxu0 %v254
    %1184 = vmatprep.subr.mxu0 0.0
    %1185 = vmatpush1.msra.mxu0 %v255
    %1186 = vmatprep.subr.mxu0 0.0
    %1187 = vmatpush1.msra.mxu0 %v256
    %1188 = vmatprep.subr.mxu0 0.0
    %1189 = vmatpush1.msra.mxu0 %v257
    %1190 = vmatprep.subr.mxu0 0.0
    %1191 = vmatpush1.msra.mxu0 %v258
    %1192 = vmatprep.subr.mxu0 0.0
    %1193 = vmatpush1.msra.mxu0 %v259
    %1194 = vmatprep.subr.mxu0 0.0
    %1195 = vmatpush1.msra.mxu0 %v260
    %1196 = vmatprep.subr.mxu0 0.0
    %1197 = vmatpush1.msra.mxu0 0.0
    %1198 = vmatprep.subr.mxu0 0.0
    %1199 = vmatpush1.msra.mxu0 0.0
    %1200 = vmatprep.subr.mxu0 0.0
    %1201 = vmatpush1.msra.mxu0 0.0
    %1202 = vmatprep.subr.mxu0 0.0
    %1203 = vmatpush1.msra.mxu0 0.0
    %1204 = vmatprep.subr.mxu0 0.0
    %1205 = vmatpush1.msra.mxu0 0.0
    %1206 = vmatprep.subr.mxu0 0.0
    %1207 = vmatpush1.msra.mxu0 0.0
    %1208 = vmatprep.subr.mxu0 0.0
    %1209 = vmatpush1.msra.mxu0 0.0
    %1210 = vmatprep.subr.mxu0 0.0
    %1211 = vmatpush1.msra.mxu0 0.0
    %1212 = vmatprep.subr.mxu0 0.0
    %1213 = vmatpush1.msra.mxu0 0.0
    %1214 = vmatprep.subr.mxu0 0.0
    %1215 = vmatpush1.msra.mxu0 0.0
    %1216 = vmatprep.subr.mxu0 0.0
    %1217 = vmatpush1.msra.mxu0 0.0
    %1218 = vmatprep.subr.mxu0 0.0
    %1219 = vmatpush1.msra.mxu0 0.0
    %1220 = vmatprep.subr.mxu0 0.0
    %1221 = vmatpush1.msra.mxu0 0.0
    %1222 = vmatprep.subr.mxu0 0.0
    %1223 = vmatpush1.msra.mxu0 0.0
    %1224 = vmatprep.subr.mxu0 0.0
    %1225 = vmatpush1.msra.mxu0 0.0
    %1226 = vmatprep.subr.mxu0 0.0
    %1227 = vmatpush1.msra.mxu0 0.0
    %1228 = vmatprep.mubr.f32.mxu0 0.0
    %1229 = vmatmul.mubr.f32.gmra.mrb[0].mxu0 %v1038
    %v1230 = vpop.f32.mrb[0].mxu0
    %v1231 = vadd.f32 0.0, %v1230
    %v1232 = vpop.f32.mrb[0].mxu0
    %1233 = vdwg.mxu0
    %v1236 = vrot.slane %v1162, 3
    %v1237 = vrot.slane %v1163, 2
    %v1238 = vsel %vm413, %v1237, %v1236
    %1240 = vmatprep.subr.mxu0 0.0
    %1241 = vmatpush1.msra.mxu0 %v229
    %1242 = vmatprep.subr.mxu0 0.0
    %1243 = vmatpush1.msra.mxu0 %v230
    %1244 = vmatprep.subr.mxu0 0.0
    %1245 = vmatpush1.msra.mxu0 %v231
    %1246 = vmatprep.subr.mxu0 0.0
    %1247 = vmatpush1.msra.mxu0 %v232
    %1248 = vmatprep.subr.mxu0 0.0
    %1249 = vmatpush1.msra.mxu0 %v233
    %1250 = vmatprep.subr.mxu0 0.0
    %1251 = vmatpush1.msra.mxu0 %v234
    %1252 = vmatprep.subr.mxu0 0.0
    %1253 = vmatpush1.msra.mxu0 %v235
    %1254 = vmatprep.subr.mxu0 0.0
    %1255 = vmatpush1.msra.mxu0 %v236
    %1256 = vmatprep.subr.mxu0 0.0
    %1257 = vmatpush1.msra.mxu0 %v237
    %1258 = vmatprep.subr.mxu0 0.0
    %1259 = vmatpush1.msra.mxu0 %v238
    %1260 = vmatprep.subr.mxu0 0.0
    %1261 = vmatpush1.msra.mxu0 %v239
    %1262 = vmatprep.subr.mxu0 0.0
    %1263 = vmatpush1.msra.mxu0 %v240
    %1264 = vmatprep.subr.mxu0 0.0
    %1265 = vmatpush1.msra.mxu0 %v241
    %1266 = vmatprep.subr.mxu0 0.0
    %1267 = vmatpush1.msra.mxu0 %v242
    %1268 = vmatprep.subr.mxu0 0.0
    %1269 = vmatpush1.msra.mxu0 %v243
    %1270 = vmatprep.subr.mxu0 0.0
    %1271 = vmatpush1.msra.mxu0 %v244
    %1272 = vmatprep.subr.mxu0 0.0
    %1273 = vmatpush1.msra.mxu0 0.0
    %1274 = vmatprep.subr.mxu0 0.0
    %1275 = vmatpush1.msra.mxu0 0.0
    %1276 = vmatprep.subr.mxu0 0.0
    %1277 = vmatpush1.msra.mxu0 0.0
    %1278 = vmatprep.subr.mxu0 0.0
    %1279 = vmatpush1.msra.mxu0 0.0
    %1280 = vmatprep.subr.mxu0 0.0
    %1281 = vmatpush1.msra.mxu0 0.0
    %1282 = vmatprep.subr.mxu0 0.0
    %1283 = vmatpush1.msra.mxu0 0.0
    %1284 = vmatprep.subr.mxu0 0.0
    %1285 = vmatpush1.msra.mxu0 0.0
    %1286 = vmatprep.subr.mxu0 0.0
    %1287 = vmatpush1.msra.mxu0 0.0
    %1288 = vmatprep.subr.mxu0 0.0
    %1289 = vmatpush1.msra.mxu0 0.0
    %1290 = vmatprep.subr.mxu0 0.0
    %1291 = vmatpush1.msra.mxu0 0.0
    %1292 = vmatprep.subr.mxu0 0.0
    %1293 = vmatpush1.msra.mxu0 0.0
    %1294 = vmatprep.subr.mxu0 0.0
    %1295 = vmatpush1.msra.mxu0 0.0
    %1296 = vmatprep.subr.mxu0 0.0
    %1297 = vmatpush1.msra.mxu0 0.0
    %1298 = vmatprep.subr.mxu0 0.0
    %1299 = vmatpush1.msra.mxu0 0.0
    %1300 = vmatprep.subr.mxu0 0.0
    %1301 = vmatpush1.msra.mxu0 0.0
    %1302 = vmatprep.subr.mxu0 0.0
    %1303 = vmatpush1.msra.mxu0 0.0
    %1304 = vmatprep.mubr.f32.mxu0 0.0
    %1305 = vmatmul.mubr.f32.gmra.mrb[0].mxu0 %v1238
    %v1306 = vpop.f32.mrb[0].mxu0
    %v1307 = vadd.f32 %v1231, %v1306
    %v1308 = vpop.f32.mrb[0].mxu0
    %1309 = vdwg.mxu0
    %v1310 = vadd.f32 %v1307, %v490
    %v1311 = vtanh.pop %v1310
    %v1312 = vsel %vm494, %v1311, -inf
    %v1313 = vrot.slane %v1312, 4
    %v1314 = vmax.f32 %v1312, %v1313
    %v1315 = vrot.slane %v1314, 2
    %v1316 = vmax.f32 %v1314, %v1315
    %v1317 = vrot.slane %v1316, 1
    %v1318 = vmax.f32 %v1316, %v1317
    %v1319 = vsub.f32 %v1311, %v1318
    %v1320 = vmul.f32 %v1319, 1.442695
    %v1321 = vpow.pop %v1320
    %v1322 = vsel %vm494, %v1321, 0.0
    %v1323 = vrot.slane %v1322, 4
    %v1324 = vadd.f32 %v1322, %v1323
    %v1325 = vrot.slane %v1324, 2
    %v1326 = vadd.f32 %v1324, %v1325
    %v1327 = vrot.slane %v1326, 1
    %v1328 = vadd.f32 %v1326, %v1327
    %v1329 = vrcp.pop %v1328
    %v1330 = vmul.f32 %v1321, %v1329
    %v1333 = vunpack.c.l.s4 1966171168
    %v1334 = vunpack.c.0.s8 %v1333
    %v1335 = vlaneseq
    %v1336 = vshrl.u32 %v1335, 7
    %v1337 = vsub.s32 %v1334, %v1336
    %v1338 = vrot.slane %v1330, %v1337
    %v1339 = vcombine.high %v1338, %v1338
    %v1341 = vunpack.c.l.s4 1966171168
    %v1342 = vunpack.c.0.s8 %v1341
    %v1343 = vlaneseq
    %v1344 = vshrl.u32 %v1343, 7
    %v1345 = vsub.s32 %v1342, %v1344
    %v1346 = vrot.slane %v1338, %v1345
    %v1348 = vunpack.c.l.s4 1966171168
    %v1349 = vunpack.c.0.s8 %v1348
    %v1350 = vlaneseq
    %v1351 = vshrl.u32 %v1350, 7
    %v1352 = vsub.s32 %v1349, %v1351
    %v1353 = vrot.slane %v1339, %v1352
    %1356 = vst [vmem:[#allocation11 + $0x3] sm:$0x1] %v1346
    %1357 = vst [vmem:[#allocation11 + $0xb] sm:$0x1] %v1353
    %1358 = vmatprep.subr.mxu0 0.0
    %1359 = vmatpush1.msra.mxu0 %v213
    %1360 = vmatprep.subr.mxu0 0.0
    %1361 = vmatpush1.msra.mxu0 %v214
    %1362 = vmatprep.subr.mxu0 0.0
    %1363 = vmatpush1.msra.mxu0 %v215
    %1364 = vmatprep.subr.mxu0 0.0
    %1365 = vmatpush1.msra.mxu0 %v216
    %1366 = vmatprep.subr.mxu0 0.0
    %1367 = vmatpush1.msra.mxu0 %v217
    %1368 = vmatprep.subr.mxu0 0.0
    %1369 = vmatpush1.msra.mxu0 %v218
    %1370 = vmatprep.subr.mxu0 0.0
    %1371 = vmatpush1.msra.mxu0 %v219
    %1372 = vmatprep.subr.mxu0 0.0
    %1373 = vmatpush1.msra.mxu0 %v220
    %1374 = vmatprep.subr.mxu0 0.0
    %1375 = vmatpush1.msra.mxu0 %v221
    %1376 = vmatprep.subr.mxu0 0.0
    %1377 = vmatpush1.msra.mxu0 %v222
    %1378 = vmatprep.subr.mxu0 0.0
    %1379 = vmatpush1.msra.mxu0 %v223
    %1380 = vmatprep.subr.mxu0 0.0
    %1381 = vmatpush1.msra.mxu0 %v224
    %1382 = vmatprep.subr.mxu0 0.0
    %1383 = vmatpush1.msra.mxu0 %v225
    %1384 = vmatprep.subr.mxu0 0.0
    %1385 = vmatpush1.msra.mxu0 %v226
    %1386 = vmatprep.subr.mxu0 0.0
    %1387 = vmatpush1.msra.mxu0 %v227
    %1388 = vmatprep.subr.mxu0 0.0
    %1389 = vmatpush1.msra.mxu0 %v228
    %1390 = vmatprep.subr.mxu0 0.0
    %1391 = vmatpush1.msra.mxu0 0.0
    %1392 = vmatprep.subr.mxu0 0.0
    %1393 = vmatpush1.msra.mxu0 0.0
    %1394 = vmatprep.subr.mxu0 0.0
    %1395 = vmatpush1.msra.mxu0 0.0
    %1396 = vmatprep.subr.mxu0 0.0
    %1397 = vmatpush1.msra.mxu0 0.0
    %1398 = vmatprep.subr.mxu0 0.0
    %1399 = vmatpush1.msra.mxu0 0.0
    %1400 = vmatprep.subr.mxu0 0.0
    %1401 = vmatpush1.msra.mxu0 0.0
    %1402 = vmatprep.subr.mxu0 0.0
    %1403 = vmatpush1.msra.mxu0 0.0
    %1404 = vmatprep.subr.mxu0 0.0
    %1405 = vmatpush1.msra.mxu0 0.0
    %1406 = vmatprep.subr.mxu0 0.0
    %1407 = vmatpush1.msra.mxu0 0.0
    %1408 = vmatprep.subr.mxu0 0.0
    %1409 = vmatpush1.msra.mxu0 0.0
    %1410 = vmatprep.subr.mxu0 0.0
    %1411 = vmatpush1.msra.mxu0 0.0
    %1412 = vmatprep.subr.mxu0 0.0
    %1413 = vmatpush1.msra.mxu0 0.0
    %1414 = vmatprep.subr.mxu0 0.0
    %1415 = vmatpush1.msra.mxu0 0.0
    %1416 = vmatprep.subr.mxu0 0.0
    %1417 = vmatpush1.msra.mxu0 0.0
    %1418 = vmatprep.subr.mxu0 0.0
    %1419 = vmatpush1.msra.mxu0 0.0
    %1420 = vmatprep.subr.mxu0 0.0
    %1421 = vmatpush1.msra.mxu0 0.0
    %1422 = vmatprep.mubr.f32.mxu0 0.0
    %1423 = vmatmul.mubr.f32.gmra.mrb[0].mxu0 %v1238
    %v1424 = vpop.f32.mrb[0].mxu0
    %v1425 = vadd.f32 0.0, %v1424
    %v1426 = vpop.f32.mrb[0].mxu0
    %1427 = vdwg.mxu0
    %v1429 = vrot.slane %v1425, 4
    %v1430 = vrot.slane %v1425, 5
    %v1433 = vadd.f32 %v205, %v1429
    %v1434 = vadd.f32 %v210, %v1430
    %v1435 = vtanh.pop %v1433
    %v1436 = vtanh.pop %v1434
    %1437 = vmatprep.subr.mxu0 0.0
    %1438 = vmatpush1.msra.mxu0 %v245
    %1439 = vmatprep.subr.mxu0 0.0
    %1440 = vmatpush1.msra.mxu0 %v246
    %1441 = vmatprep.subr.mxu0 0.0
    %1442 = vmatpush1.msra.mxu0 %v247
    %1443 = vmatprep.subr.mxu0 0.0
    %1444 = vmatpush1.msra.mxu0 %v248
    %1445 = vmatprep.subr.mxu0 0.0
    %1446 = vmatpush1.msra.mxu0 %v249
    %1447 = vmatprep.subr.mxu0 0.0
    %1448 = vmatpush1.msra.mxu0 %v250
    %1449 = vmatprep.subr.mxu0 0.0
    %1450 = vmatpush1.msra.mxu0 %v251
    %1451 = vmatprep.subr.mxu0 0.0
    %1452 = vmatpush1.msra.mxu0 %v252
    %1453 = vmatprep.subr.mxu0 0.0
    %1454 = vmatpush1.msra.mxu0 %v253
    %1455 = vmatprep.subr.mxu0 0.0
    %1456 = vmatpush1.msra.mxu0 %v254
    %1457 = vmatprep.subr.mxu0 0.0
    %1458 = vmatpush1.msra.mxu0 %v255
    %1459 = vmatprep.subr.mxu0 0.0
    %1460 = vmatpush1.msra.mxu0 %v256
    %1461 = vmatprep.subr.mxu0 0.0
    %1462 = vmatpush1.msra.mxu0 %v257
    %1463 = vmatprep.subr.mxu0 0.0
    %1464 = vmatpush1.msra.mxu0 %v258
    %1465 = vmatprep.subr.mxu0 0.0
    %1466 = vmatpush1.msra.mxu0 %v259
    %1467 = vmatprep.subr.mxu0 0.0
    %1468 = vmatpush1.msra.mxu0 %v260
    %1469 = vmatprep.subr.mxu0 0.0
    %1470 = vmatpush1.msra.mxu0 0.0
    %1471 = vmatprep.subr.mxu0 0.0
    %1472 = vmatpush1.msra.mxu0 0.0
    %1473 = vmatprep.subr.mxu0 0.0
    %1474 = vmatpush1.msra.mxu0 0.0
    %1475 = vmatprep.subr.mxu0 0.0
    %1476 = vmatpush1.msra.mxu0 0.0
    %1477 = vmatprep.subr.mxu0 0.0
    %1478 = vmatpush1.msra.mxu0 0.0
    %1479 = vmatprep.subr.mxu0 0.0
    %1480 = vmatpush1.msra.mxu0 0.0
    %1481 = vmatprep.subr.mxu0 0.0
    %1482 = vmatpush1.msra.mxu0 0.0
    %1483 = vmatprep.subr.mxu0 0.0
    %1484 = vmatpush1.msra.mxu0 0.0
    %1485 = vmatprep.subr.mxu0 0.0
    %1486 = vmatpush1.msra.mxu0 0.0
    %1487 = vmatprep.subr.mxu0 0.0
    %1488 = vmatpush1.msra.mxu0 0.0
    %1489 = vmatprep.subr.mxu0 0.0
    %1490 = vmatpush1.msra.mxu0 0.0
    %1491 = vmatprep.subr.mxu0 0.0
    %1492 = vmatpush1.msra.mxu0 0.0
    %1493 = vmatprep.subr.mxu0 0.0
    %1494 = vmatpush1.msra.mxu0 0.0
    %1495 = vmatprep.subr.mxu0 0.0
    %1496 = vmatpush1.msra.mxu0 0.0
    %1497 = vmatprep.subr.mxu0 0.0
    %1498 = vmatpush1.msra.mxu0 0.0
    %1499 = vmatprep.subr.mxu0 0.0
    %1500 = vmatpush1.msra.mxu0 0.0
    %1501 = vmatprep.mubr.f32.mxu0 0.0
    %1502 = vmatmul.mubr.f32.gmra.mrb[0].mxu0 %v1311
    %v1503 = vpop.f32.mrb[0].mxu0
    %v1504 = vadd.f32 0.0, %v1503
    %v1505 = vpop.f32.mrb[0].mxu0
    %1506 = vdwg.mxu0
    %v1509 = vrot.slane %v1435, 4
    %v1510 = vrot.slane %v1436, 3
    %v1511 = vsel %vm413, %v1510, %v1509
    %1513 = vmatprep.subr.mxu0 0.0
    %1514 = vmatpush1.msra.mxu0 %v229
    %1515 = vmatprep.subr.mxu0 0.0
    %1516 = vmatpush1.msra.mxu0 %v230
    %1517 = vmatprep.subr.mxu0 0.0
    %1518 = vmatpush1.msra.mxu0 %v231
    %1519 = vmatprep.subr.mxu0 0.0
    %1520 = vmatpush1.msra.mxu0 %v232
    %1521 = vmatprep.subr.mxu0 0.0
    %1522 = vmatpush1.msra.mxu0 %v233
    %1523 = vmatprep.subr.mxu0 0.0
    %1524 = vmatpush1.msra.mxu0 %v234
    %1525 = vmatprep.subr.mxu0 0.0
    %1526 = vmatpush1.msra.mxu0 %v235
    %1527 = vmatprep.subr.mxu0 0.0
    %1528 = vmatpush1.msra.mxu0 %v236
    %1529 = vmatprep.subr.mxu0 0.0
    %1530 = vmatpush1.msra.mxu0 %v237
    %1531 = vmatprep.subr.mxu0 0.0
    %1532 = vmatpush1.msra.mxu0 %v238
    %1533 = vmatprep.subr.mxu0 0.0
    %1534 = vmatpush1.msra.mxu0 %v239
    %1535 = vmatprep.subr.mxu0 0.0
    %1536 = vmatpush1.msra.mxu0 %v240
    %1537 = vmatprep.subr.mxu0 0.0
    %1538 = vmatpush1.msra.mxu0 %v241
    %1539 = vmatprep.subr.mxu0 0.0
    %1540 = vmatpush1.msra.mxu0 %v242
    %1541 = vmatprep.subr.mxu0 0.0
    %1542 = vmatpush1.msra.mxu0 %v243
    %1543 = vmatprep.subr.mxu0 0.0
    %1544 = vmatpush1.msra.mxu0 %v244
    %1545 = vmatprep.subr.mxu0 0.0
    %1546 = vmatpush1.msra.mxu0 0.0
    %1547 = vmatprep.subr.mxu0 0.0
    %1548 = vmatpush1.msra.mxu0 0.0
    %1549 = vmatprep.subr.mxu0 0.0
    %1550 = vmatpush1.msra.mxu0 0.0
    %1551 = vmatprep.subr.mxu0 0.0
    %1552 = vmatpush1.msra.mxu0 0.0
    %1553 = vmatprep.subr.mxu0 0.0
    %1554 = vmatpush1.msra.mxu0 0.0
    %1555 = vmatprep.subr.mxu0 0.0
    %1556 = vmatpush1.msra.mxu0 0.0
    %1557 = vmatprep.subr.mxu0 0.0
    %1558 = vmatpush1.msra.mxu0 0.0
    %1559 = vmatprep.subr.mxu0 0.0
    %1560 = vmatpush1.msra.mxu0 0.0
    %1561 = vmatprep.subr.mxu0 0.0
    %1562 = vmatpush1.msra.mxu0 0.0
    %1563 = vmatprep.subr.mxu0 0.0
    %1564 = vmatpush1.msra.mxu0 0.0
    %1565 = vmatprep.subr.mxu0 0.0
    %1566 = vmatpush1.msra.mxu0 0.0
    %1567 = vmatprep.subr.mxu0 0.0
    %1568 = vmatpush1.msra.mxu0 0.0
    %1569 = vmatprep.subr.mxu0 0.0
    %1570 = vmatpush1.msra.mxu0 0.0
    %1571 = vmatprep.subr.mxu0 0.0
    %1572 = vmatpush1.msra.mxu0 0.0
    %1573 = vmatprep.subr.mxu0 0.0
    %1574 = vmatpush1.msra.mxu0 0.0
    %1575 = vmatprep.subr.mxu0 0.0
    %1576 = vmatpush1.msra.mxu0 0.0
    %1577 = vmatprep.mubr.f32.mxu0 0.0
    %1578 = vmatmul.mubr.f32.gmra.mrb[0].mxu0 %v1511
    %v1579 = vpop.f32.mrb[0].mxu0
    %v1580 = vadd.f32 %v1504, %v1579
    %v1581 = vpop.f32.mrb[0].mxu0
    %1582 = vdwg.mxu0
    %v1583 = vadd.f32 %v1580, %v490
    %v1584 = vtanh.pop %v1583
    %v1585 = vsel %vm494, %v1584, -inf
    %v1586 = vrot.slane %v1585, 4
    %v1587 = vmax.f32 %v1585, %v1586
    %v1588 = vrot.slane %v1587, 2
    %v1589 = vmax.f32 %v1587, %v1588
    %v1590 = vrot.slane %v1589, 1
    %v1591 = vmax.f32 %v1589, %v1590
    %v1592 = vsub.f32 %v1584, %v1591
    %v1593 = vmul.f32 %v1592, 1.442695
    %v1594 = vpow.pop %v1593
    %v1595 = vsel %vm494, %v1594, 0.0
    %v1596 = vrot.slane %v1595, 4
    %v1597 = vadd.f32 %v1595, %v1596
    %v1598 = vrot.slane %v1597, 2
    %v1599 = vadd.f32 %v1597, %v1598
    %v1600 = vrot.slane %v1599, 1
    %v1601 = vadd.f32 %v1599, %v1600
    %v1602 = vrcp.pop %v1601
    %v1603 = vmul.f32 %v1594, %v1602
    %v1606 = vunpack.c.l.s4 1966171168
    %v1607 = vunpack.c.0.s8 %v1606
    %v1608 = vlaneseq
    %v1609 = vshrl.u32 %v1608, 7
    %v1610 = vsub.s32 %v1607, %v1609
    %v1611 = vrot.slane %v1603, %v1610
    %v1612 = vcombine.high %v1611, %v1611
    %v1614 = vunpack.c.l.s4 1966171168
    %v1615 = vunpack.c.0.s8 %v1614
    %v1616 = vlaneseq
    %v1617 = vshrl.u32 %v1616, 7
    %v1618 = vsub.s32 %v1615, %v1617
    %v1619 = vrot.slane %v1611, %v1618
    %v1621 = vunpack.c.l.s4 1966171168
    %v1622 = vunpack.c.0.s8 %v1621
    %v1623 = vlaneseq
    %v1624 = vshrl.u32 %v1623, 7
    %v1625 = vsub.s32 %v1622, %v1624
    %v1626 = vrot.slane %v1612, %v1625
    %1629 = vst [vmem:[#allocation11 + $0x4] sm:$0x1] %v1619
    %1630 = vst [vmem:[#allocation11 + $0xc] sm:$0x1] %v1626
    %1631 = vmatprep.subr.mxu0 0.0
    %1632 = vmatpush1.msra.mxu0 %v213
    %1633 = vmatprep.subr.mxu0 0.0
    %1634 = vmatpush1.msra.mxu0 %v214
    %1635 = vmatprep.subr.mxu0 0.0
    %1636 = vmatpush1.msra.mxu0 %v215
    %1637 = vmatprep.subr.mxu0 0.0
    %1638 = vmatpush1.msra.mxu0 %v216
    %1639 = vmatprep.subr.mxu0 0.0
    %1640 = vmatpush1.msra.mxu0 %v217
    %1641 = vmatprep.subr.mxu0 0.0
    %1642 = vmatpush1.msra.mxu0 %v218
    %1643 = vmatprep.subr.mxu0 0.0
    %1644 = vmatpush1.msra.mxu0 %v219
    %1645 = vmatprep.subr.mxu0 0.0
    %1646 = vmatpush1.msra.mxu0 %v220
    %1647 = vmatprep.subr.mxu0 0.0
    %1648 = vmatpush1.msra.mxu0 %v221
    %1649 = vmatprep.subr.mxu0 0.0
    %1650 = vmatpush1.msra.mxu0 %v222
    %1651 = vmatprep.subr.mxu0 0.0
    %1652 = vmatpush1.msra.mxu0 %v223
    %1653 = vmatprep.subr.mxu0 0.0
    %1654 = vmatpush1.msra.mxu0 %v224
    %1655 = vmatprep.subr.mxu0 0.0
    %1656 = vmatpush1.msra.mxu0 %v225
    %1657 = vmatprep.subr.mxu0 0.0
    %1658 = vmatpush1.msra.mxu0 %v226
    %1659 = vmatprep.subr.mxu0 0.0
    %1660 = vmatpush1.msra.mxu0 %v227
    %1661 = vmatprep.subr.mxu0 0.0
    %1662 = vmatpush1.msra.mxu0 %v228
    %1663 = vmatprep.subr.mxu0 0.0
    %1664 = vmatpush1.msra.mxu0 0.0
    %1665 = vmatprep.subr.mxu0 0.0
    %1666 = vmatpush1.msra.mxu0 0.0
    %1667 = vmatprep.subr.mxu0 0.0
    %1668 = vmatpush1.msra.mxu0 0.0
    %1669 = vmatprep.subr.mxu0 0.0
    %1670 = vmatpush1.msra.mxu0 0.0
    %1671 = vmatprep.subr.mxu0 0.0
    %1672 = vmatpush1.msra.mxu0 0.0
    %1673 = vmatprep.subr.mxu0 0.0
    %1674 = vmatpush1.msra.mxu0 0.0
    %1675 = vmatprep.subr.mxu0 0.0
    %1676 = vmatpush1.msra.mxu0 0.0
    %1677 = vmatprep.subr.mxu0 0.0
    %1678 = vmatpush1.msra.mxu0 0.0
    %1679 = vmatprep.subr.mxu0 0.0
    %1680 = vmatpush1.msra.mxu0 0.0
    %1681 = vmatprep.subr.mxu0 0.0
    %1682 = vmatpush1.msra.mxu0 0.0
    %1683 = vmatprep.subr.mxu0 0.0
    %1684 = vmatpush1.msra.mxu0 0.0
    %1685 = vmatprep.subr.mxu0 0.0
    %1686 = vmatpush1.msra.mxu0 0.0
    %1687 = vmatprep.subr.mxu0 0.0
    %1688 = vmatpush1.msra.mxu0 0.0
    %1689 = vmatprep.subr.mxu0 0.0
    %1690 = vmatpush1.msra.mxu0 0.0
    %1691 = vmatprep.subr.mxu0 0.0
    %1692 = vmatpush1.msra.mxu0 0.0
    %1693 = vmatprep.subr.mxu0 0.0
    %1694 = vmatpush1.msra.mxu0 0.0
    %1695 = vmatprep.mubr.f32.mxu0 0.0
    %1696 = vmatmul.mubr.f32.gmra.mrb[0].mxu0 %v1511
    %v1697 = vpop.f32.mrb[0].mxu0
    %v1698 = vadd.f32 0.0, %v1697
    %v1699 = vpop.f32.mrb[0].mxu0
    %1700 = vdwg.mxu0
    %v1702 = vrot.slane %v1698, 3
    %v1703 = vrot.slane %v1698, 4
    %v1706 = vadd.f32 %v205, %v1702
    %v1707 = vadd.f32 %v210, %v1703
    %v1708 = vtanh.pop %v1706
    %v1709 = vtanh.pop %v1707
    %1710 = vmatprep.subr.mxu0 0.0
    %1711 = vmatpush1.msra.mxu0 %v245
    %1712 = vmatprep.subr.mxu0 0.0
    %1713 = vmatpush1.msra.mxu0 %v246
    %1714 = vmatprep.subr.mxu0 0.0
    %1715 = vmatpush1.msra.mxu0 %v247
    %1716 = vmatprep.subr.mxu0 0.0
    %1717 = vmatpush1.msra.mxu0 %v248
    %1718 = vmatprep.subr.mxu0 0.0
    %1719 = vmatpush1.msra.mxu0 %v249
    %1720 = vmatprep.subr.mxu0 0.0
    %1721 = vmatpush1.msra.mxu0 %v250
    %1722 = vmatprep.subr.mxu0 0.0
    %1723 = vmatpush1.msra.mxu0 %v251
    %1724 = vmatprep.subr.mxu0 0.0
    %1725 = vmatpush1.msra.mxu0 %v252
    %1726 = vmatprep.subr.mxu0 0.0
    %1727 = vmatpush1.msra.mxu0 %v253
    %1728 = vmatprep.subr.mxu0 0.0
    %1729 = vmatpush1.msra.mxu0 %v254
    %1730 = vmatprep.subr.mxu0 0.0
    %1731 = vmatpush1.msra.mxu0 %v255
    %1732 = vmatprep.subr.mxu0 0.0
    %1733 = vmatpush1.msra.mxu0 %v256
    %1734 = vmatprep.subr.mxu0 0.0
    %1735 = vmatpush1.msra.mxu0 %v257
    %1736 = vmatprep.subr.mxu0 0.0
    %1737 = vmatpush1.msra.mxu0 %v258
    %1738 = vmatprep.subr.mxu0 0.0
    %1739 = vmatpush1.msra.mxu0 %v259
    %1740 = vmatprep.subr.mxu0 0.0
    %1741 = vmatpush1.msra.mxu0 %v260
    %1742 = vmatprep.subr.mxu0 0.0
    %1743 = vmatpush1.msra.mxu0 0.0
    %1744 = vmatprep.subr.mxu0 0.0
    %1745 = vmatpush1.msra.mxu0 0.0
    %1746 = vmatprep.subr.mxu0 0.0
    %1747 = vmatpush1.msra.mxu0 0.0
    %1748 = vmatprep.subr.mxu0 0.0
    %1749 = vmatpush1.msra.mxu0 0.0
    %1750 = vmatprep.subr.mxu0 0.0
    %1751 = vmatpush1.msra.mxu0 0.0
    %1752 = vmatprep.subr.mxu0 0.0
    %1753 = vmatpush1.msra.mxu0 0.0
    %1754 = vmatprep.subr.mxu0 0.0
    %1755 = vmatpush1.msra.mxu0 0.0
    %1756 = vmatprep.subr.mxu0 0.0
    %1757 = vmatpush1.msra.mxu0 0.0
    %1758 = vmatprep.subr.mxu0 0.0
    %1759 = vmatpush1.msra.mxu0 0.0
    %1760 = vmatprep.subr.mxu0 0.0
    %1761 = vmatpush1.msra.mxu0 0.0
    %1762 = vmatprep.subr.mxu0 0.0
    %1763 = vmatpush1.msra.mxu0 0.0
    %1764 = vmatprep.subr.mxu0 0.0
    %1765 = vmatpush1.msra.mxu0 0.0
    %1766 = vmatprep.subr.mxu0 0.0
    %1767 = vmatpush1.msra.mxu0 0.0
    %1768 = vmatprep.subr.mxu0 0.0
    %1769 = vmatpush1.msra.mxu0 0.0
    %1770 = vmatprep.subr.mxu0 0.0
    %1771 = vmatpush1.msra.mxu0 0.0
    %1772 = vmatprep.subr.mxu0 0.0
    %1773 = vmatpush1.msra.mxu0 0.0
    %1774 = vmatprep.mubr.f32.mxu0 0.0
    %1775 = vmatmul.mubr.f32.gmra.mrb[0].mxu0 %v1584
    %v1776 = vpop.f32.mrb[0].mxu0
    %v1777 = vadd.f32 0.0, %v1776
    %v1778 = vpop.f32.mrb[0].mxu0
    %1779 = vdwg.mxu0
    %v1782 = vrot.slane %v1708, 5
    %v1783 = vrot.slane %v1709, 4
    %v1784 = vsel %vm413, %v1783, %v1782
    %1786 = vmatprep.subr.mxu0 0.0
    %1787 = vmatpush1.msra.mxu0 %v229
    %1788 = vmatprep.subr.mxu0 0.0
    %1789 = vmatpush1.msra.mxu0 %v230
    %1790 = vmatprep.subr.mxu0 0.0
    %1791 = vmatpush1.msra.mxu0 %v231
    %1792 = vmatprep.subr.mxu0 0.0
    %1793 = vmatpush1.msra.mxu0 %v232
    %1794 = vmatprep.subr.mxu0 0.0
    %1795 = vmatpush1.msra.mxu0 %v233
    %1796 = vmatprep.subr.mxu0 0.0
    %1797 = vmatpush1.msra.mxu0 %v234
    %1798 = vmatprep.subr.mxu0 0.0
    %1799 = vmatpush1.msra.mxu0 %v235
    %1800 = vmatprep.subr.mxu0 0.0
    %1801 = vmatpush1.msra.mxu0 %v236
    %1802 = vmatprep.subr.mxu0 0.0
    %1803 = vmatpush1.msra.mxu0 %v237
    %1804 = vmatprep.subr.mxu0 0.0
    %1805 = vmatpush1.msra.mxu0 %v238
    %1806 = vmatprep.subr.mxu0 0.0
    %1807 = vmatpush1.msra.mxu0 %v239
    %1808 = vmatprep.subr.mxu0 0.0
    %1809 = vmatpush1.msra.mxu0 %v240
    %1810 = vmatprep.subr.mxu0 0.0
    %1811 = vmatpush1.msra.mxu0 %v241
    %1812 = vmatprep.subr.mxu0 0.0
    %1813 = vmatpush1.msra.mxu0 %v242
    %1814 = vmatprep.subr.mxu0 0.0
    %1815 = vmatpush1.msra.mxu0 %v243
    %1816 = vmatprep.subr.mxu0 0.0
    %1817 = vmatpush1.msra.mxu0 %v244
    %1818 = vmatprep.subr.mxu0 0.0
    %1819 = vmatpush1.msra.mxu0 0.0
    %1820 = vmatprep.subr.mxu0 0.0
    %1821 = vmatpush1.msra.mxu0 0.0
    %1822 = vmatprep.subr.mxu0 0.0
    %1823 = vmatpush1.msra.mxu0 0.0
    %1824 = vmatprep.subr.mxu0 0.0
    %1825 = vmatpush1.msra.mxu0 0.0
    %1826 = vmatprep.subr.mxu0 0.0
    %1827 = vmatpush1.msra.mxu0 0.0
    %1828 = vmatprep.subr.mxu0 0.0
    %1829 = vmatpush1.msra.mxu0 0.0
    %1830 = vmatprep.subr.mxu0 0.0
    %1831 = vmatpush1.msra.mxu0 0.0
    %1832 = vmatprep.subr.mxu0 0.0
    %1833 = vmatpush1.msra.mxu0 0.0
    %1834 = vmatprep.subr.mxu0 0.0
    %1835 = vmatpush1.msra.mxu0 0.0
    %1836 = vmatprep.subr.mxu0 0.0
    %1837 = vmatpush1.msra.mxu0 0.0
    %1838 = vmatprep.subr.mxu0 0.0
    %1839 = vmatpush1.msra.mxu0 0.0
    %1840 = vmatprep.subr.mxu0 0.0
    %1841 = vmatpush1.msra.mxu0 0.0
    %1842 = vmatprep.subr.mxu0 0.0
    %1843 = vmatpush1.msra.mxu0 0.0
    %1844 = vmatprep.subr.mxu0 0.0
    %1845 = vmatpush1.msra.mxu0 0.0
    %1846 = vmatprep.subr.mxu0 0.0
    %1847 = vmatpush1.msra.mxu0 0.0
    %1848 = vmatprep.subr.mxu0 0.0
    %1849 = vmatpush1.msra.mxu0 0.0
    %1850 = vmatprep.mubr.f32.mxu0 0.0
    %1851 = vmatmul.mubr.f32.gmra.mrb[0].mxu0 %v1784
    %v1852 = vpop.f32.mrb[0].mxu0
    %v1853 = vadd.f32 %v1777, %v1852
    %v1854 = vpop.f32.mrb[0].mxu0
    %1855 = vdwg.mxu0
    %v1856 = vadd.f32 %v1853, %v490
    %v1857 = vtanh.pop %v1856
    %v1858 = vsel %vm494, %v1857, -inf
    %v1859 = vrot.slane %v1858, 4
    %v1860 = vmax.f32 %v1858, %v1859
    %v1861 = vrot.slane %v1860, 2
    %v1862 = vmax.f32 %v1860, %v1861
    %v1863 = vrot.slane %v1862, 1
    %v1864 = vmax.f32 %v1862, %v1863
    %v1865 = vsub.f32 %v1857, %v1864
    %v1866 = vmul.f32 %v1865, 1.442695
    %v1867 = vpow.pop %v1866
    %v1868 = vsel %vm494, %v1867, 0.0
    %v1869 = vrot.slane %v1868, 4
    %v1870 = vadd.f32 %v1868, %v1869
    %v1871 = vrot.slane %v1870, 2
    %v1872 = vadd.f32 %v1870, %v1871
    %v1873 = vrot.slane %v1872, 1
    %v1874 = vadd.f32 %v1872, %v1873
    %v1875 = vrcp.pop %v1874
    %v1876 = vmul.f32 %v1867, %v1875
    %v1879 = vunpack.c.l.s4 1966171168
    %v1880 = vunpack.c.0.s8 %v1879
    %v1881 = vlaneseq
    %v1882 = vshrl.u32 %v1881, 7
    %v1883 = vsub.s32 %v1880, %v1882
    %v1884 = vrot.slane %v1876, %v1883
    %v1885 = vcombine.high %v1884, %v1884
    %v1887 = vunpack.c.l.s4 1966171168
    %v1888 = vunpack.c.0.s8 %v1887
    %v1889 = vlaneseq
    %v1890 = vshrl.u32 %v1889, 7
    %v1891 = vsub.s32 %v1888, %v1890
    %v1892 = vrot.slane %v1884, %v1891
    %v1894 = vunpack.c.l.s4 1966171168
    %v1895 = vunpack.c.0.s8 %v1894
    %v1896 = vlaneseq
    %v1897 = vshrl.u32 %v1896, 7
    %v1898 = vsub.s32 %v1895, %v1897
    %v1899 = vrot.slane %v1885, %v1898
    %1902 = vst [vmem:[#allocation11 + $0x5] sm:$0x1] %v1892
    %1903 = vst [vmem:[#allocation11 + $0xd] sm:$0x1] %v1899
    %1904 = vmatprep.subr.mxu0 0.0
    %1905 = vmatpush1.msra.mxu0 %v213
    %1906 = vmatprep.subr.mxu0 0.0
    %1907 = vmatpush1.msra.mxu0 %v214
    %1908 = vmatprep.subr.mxu0 0.0
    %1909 = vmatpush1.msra.mxu0 %v215
    %1910 = vmatprep.subr.mxu0 0.0
    %1911 = vmatpush1.msra.mxu0 %v216
    %1912 = vmatprep.subr.mxu0 0.0
    %1913 = vmatpush1.msra.mxu0 %v217
    %1914 = vmatprep.subr.mxu0 0.0
    %1915 = vmatpush1.msra.mxu0 %v218
    %1916 = vmatprep.subr.mxu0 0.0
    %1917 = vmatpush1.msra.mxu0 %v219
    %1918 = vmatprep.subr.mxu0 0.0
    %1919 = vmatpush1.msra.mxu0 %v220
    %1920 = vmatprep.subr.mxu0 0.0
    %1921 = vmatpush1.msra.mxu0 %v221
    %1922 = vmatprep.subr.mxu0 0.0
    %1923 = vmatpush1.msra.mxu0 %v222
    %1924 = vmatprep.subr.mxu0 0.0
    %1925 = vmatpush1.msra.mxu0 %v223
    %1926 = vmatprep.subr.mxu0 0.0
    %1927 = vmatpush1.msra.mxu0 %v224
    %1928 = vmatprep.subr.mxu0 0.0
    %1929 = vmatpush1.msra.mxu0 %v225
    %1930 = vmatprep.subr.mxu0 0.0
    %1931 = vmatpush1.msra.mxu0 %v226
    %1932 = vmatprep.subr.mxu0 0.0
    %1933 = vmatpush1.msra.mxu0 %v227
    %1934 = vmatprep.subr.mxu0 0.0
    %1935 = vmatpush1.msra.mxu0 %v228
    %1936 = vmatprep.subr.mxu0 0.0
    %1937 = vmatpush1.msra.mxu0 0.0
    %1938 = vmatprep.subr.mxu0 0.0
    %1939 = vmatpush1.msra.mxu0 0.0
    %1940 = vmatprep.subr.mxu0 0.0
    %1941 = vmatpush1.msra.mxu0 0.0
    %1942 = vmatprep.subr.mxu0 0.0
    %1943 = vmatpush1.msra.mxu0 0.0
    %1944 = vmatprep.subr.mxu0 0.0
    %1945 = vmatpush1.msra.mxu0 0.0
    %1946 = vmatprep.subr.mxu0 0.0
    %1947 = vmatpush1.msra.mxu0 0.0
    %1948 = vmatprep.subr.mxu0 0.0
    %1949 = vmatpush1.msra.mxu0 0.0
    %1950 = vmatprep.subr.mxu0 0.0
    %1951 = vmatpush1.msra.mxu0 0.0
    %1952 = vmatprep.subr.mxu0 0.0
    %1953 = vmatpush1.msra.mxu0 0.0
    %1954 = vmatprep.subr.mxu0 0.0
    %1955 = vmatpush1.msra.mxu0 0.0
    %1956 = vmatprep.subr.mxu0 0.0
    %1957 = vmatpush1.msra.mxu0 0.0
    %1958 = vmatprep.subr.mxu0 0.0
    %1959 = vmatpush1.msra.mxu0 0.0
    %1960 = vmatprep.subr.mxu0 0.0
    %1961 = vmatpush1.msra.mxu0 0.0
    %1962 = vmatprep.subr.mxu0 0.0
    %1963 = vmatpush1.msra.mxu0 0.0
    %1964 = vmatprep.subr.mxu0 0.0
    %1965 = vmatpush1.msra.mxu0 0.0
    %1966 = vmatprep.subr.mxu0 0.0
    %1967 = vmatpush1.msra.mxu0 0.0
    %1968 = vmatprep.mubr.f32.mxu0 0.0
    %1969 = vmatmul.mubr.f32.gmra.mrb[0].mxu0 %v1784
    %v1970 = vpop.f32.mrb[0].mxu0
    %v1971 = vadd.f32 0.0, %v1970
    %v1972 = vpop.f32.mrb[0].mxu0
    %1973 = vdwg.mxu0
    %v1975 = vrot.slane %v1971, 2
    %v1976 = vrot.slane %v1971, 3
    %v1979 = vadd.f32 %v205, %v1975
    %v1980 = vadd.f32 %v210, %v1976
    %v1981 = vtanh.pop %v1979
    %v1982 = vtanh.pop %v1980
    %1983 = vmatprep.subr.mxu0 0.0
    %1984 = vmatpush1.msra.mxu0 %v245
    %1985 = vmatprep.subr.mxu0 0.0
    %1986 = vmatpush1.msra.mxu0 %v246
    %1987 = vmatprep.subr.mxu0 0.0
    %1988 = vmatpush1.msra.mxu0 %v247
    %1989 = vmatprep.subr.mxu0 0.0
    %1990 = vmatpush1.msra.mxu0 %v248
    %1991 = vmatprep.subr.mxu0 0.0
    %1992 = vmatpush1.msra.mxu0 %v249
    %1993 = vmatprep.subr.mxu0 0.0
    %1994 = vmatpush1.msra.mxu0 %v250
    %1995 = vmatprep.subr.mxu0 0.0
    %1996 = vmatpush1.msra.mxu0 %v251
    %1997 = vmatprep.subr.mxu0 0.0
    %1998 = vmatpush1.msra.mxu0 %v252
    %1999 = vmatprep.subr.mxu0 0.0
    %2000 = vmatpush1.msra.mxu0 %v253
    %2001 = vmatprep.subr.mxu0 0.0
    %2002 = vmatpush1.msra.mxu0 %v254
    %2003 = vmatprep.subr.mxu0 0.0
    %2004 = vmatpush1.msra.mxu0 %v255
    %2005 = vmatprep.subr.mxu0 0.0
    %2006 = vmatpush1.msra.mxu0 %v256
    %2007 = vmatprep.subr.mxu0 0.0
    %2008 = vmatpush1.msra.mxu0 %v257
    %2009 = vmatprep.subr.mxu0 0.0
    %2010 = vmatpush1.msra.mxu0 %v258
    %2011 = vmatprep.subr.mxu0 0.0
    %2012 = vmatpush1.msra.mxu0 %v259
    %2013 = vmatprep.subr.mxu0 0.0
    %2014 = vmatpush1.msra.mxu0 %v260
    %2015 = vmatprep.subr.mxu0 0.0
    %2016 = vmatpush1.msra.mxu0 0.0
    %2017 = vmatprep.subr.mxu0 0.0
    %2018 = vmatpush1.msra.mxu0 0.0
    %2019 = vmatprep.subr.mxu0 0.0
    %2020 = vmatpush1.msra.mxu0 0.0
    %2021 = vmatprep.subr.mxu0 0.0
    %2022 = vmatpush1.msra.mxu0 0.0
    %2023 = vmatprep.subr.mxu0 0.0
    %2024 = vmatpush1.msra.mxu0 0.0
    %2025 = vmatprep.subr.mxu0 0.0
    %2026 = vmatpush1.msra.mxu0 0.0
    %2027 = vmatprep.subr.mxu0 0.0
    %2028 = vmatpush1.msra.mxu0 0.0
    %2029 = vmatprep.subr.mxu0 0.0
    %2030 = vmatpush1.msra.mxu0 0.0
    %2031 = vmatprep.subr.mxu0 0.0
    %2032 = vmatpush1.msra.mxu0 0.0
    %2033 = vmatprep.subr.mxu0 0.0
    %2034 = vmatpush1.msra.mxu0 0.0
    %2035 = vmatprep.subr.mxu0 0.0
    %2036 = vmatpush1.msra.mxu0 0.0
    %2037 = vmatprep.subr.mxu0 0.0
    %2038 = vmatpush1.msra.mxu0 0.0
    %2039 = vmatprep.subr.mxu0 0.0
    %2040 = vmatpush1.msra.mxu0 0.0
    %2041 = vmatprep.subr.mxu0 0.0
    %2042 = vmatpush1.msra.mxu0 0.0
    %2043 = vmatprep.subr.mxu0 0.0
    %2044 = vmatpush1.msra.mxu0 0.0
    %2045 = vmatprep.subr.mxu0 0.0
    %2046 = vmatpush1.msra.mxu0 0.0
    %2047 = vmatprep.mubr.f32.mxu0 0.0
    %2048 = vmatmul.mubr.f32.gmra.mrb[0].mxu0 %v1857
    %v2049 = vpop.f32.mrb[0].mxu0
    %v2050 = vadd.f32 0.0, %v2049
    %v2051 = vpop.f32.mrb[0].mxu0
    %2052 = vdwg.mxu0
    %v2055 = vrot.slane %v1981, 6
    %v2056 = vrot.slane %v1982, 5
    %v2057 = vsel %vm413, %v2056, %v2055
    %2059 = vmatprep.subr.mxu0 0.0
    %2060 = vmatpush1.msra.mxu0 %v229
    %2061 = vmatprep.subr.mxu0 0.0
    %2062 = vmatpush1.msra.mxu0 %v230
    %2063 = vmatprep.subr.mxu0 0.0
    %2064 = vmatpush1.msra.mxu0 %v231
    %2065 = vmatprep.subr.mxu0 0.0
    %2066 = vmatpush1.msra.mxu0 %v232
    %2067 = vmatprep.subr.mxu0 0.0
    %2068 = vmatpush1.msra.mxu0 %v233
    %2069 = vmatprep.subr.mxu0 0.0
    %2070 = vmatpush1.msra.mxu0 %v234
    %2071 = vmatprep.subr.mxu0 0.0
    %2072 = vmatpush1.msra.mxu0 %v235
    %2073 = vmatprep.subr.mxu0 0.0
    %2074 = vmatpush1.msra.mxu0 %v236
    %2075 = vmatprep.subr.mxu0 0.0
    %2076 = vmatpush1.msra.mxu0 %v237
    %2077 = vmatprep.subr.mxu0 0.0
    %2078 = vmatpush1.msra.mxu0 %v238
    %2079 = vmatprep.subr.mxu0 0.0
    %2080 = vmatpush1.msra.mxu0 %v239
    %2081 = vmatprep.subr.mxu0 0.0
    %2082 = vmatpush1.msra.mxu0 %v240
    %2083 = vmatprep.subr.mxu0 0.0
    %2084 = vmatpush1.msra.mxu0 %v241
    %2085 = vmatprep.subr.mxu0 0.0
    %2086 = vmatpush1.msra.mxu0 %v242
    %2087 = vmatprep.subr.mxu0 0.0
    %2088 = vmatpush1.msra.mxu0 %v243
    %2089 = vmatprep.subr.mxu0 0.0
    %2090 = vmatpush1.msra.mxu0 %v244
    %2091 = vmatprep.subr.mxu0 0.0
    %2092 = vmatpush1.msra.mxu0 0.0
    %2093 = vmatprep.subr.mxu0 0.0
    %2094 = vmatpush1.msra.mxu0 0.0
    %2095 = vmatprep.subr.mxu0 0.0
    %2096 = vmatpush1.msra.mxu0 0.0
    %2097 = vmatprep.subr.mxu0 0.0
    %2098 = vmatpush1.msra.mxu0 0.0
    %2099 = vmatprep.subr.mxu0 0.0
    %2100 = vmatpush1.msra.mxu0 0.0
    %2101 = vmatprep.subr.mxu0 0.0
    %2102 = vmatpush1.msra.mxu0 0.0
    %2103 = vmatprep.subr.mxu0 0.0
    %2104 = vmatpush1.msra.mxu0 0.0
    %2105 = vmatprep.subr.mxu0 0.0
    %2106 = vmatpush1.msra.mxu0 0.0
    %2107 = vmatprep.subr.mxu0 0.0
    %2108 = vmatpush1.msra.mxu0 0.0
    %2109 = vmatprep.subr.mxu0 0.0
    %2110 = vmatpush1.msra.mxu0 0.0
    %2111 = vmatprep.subr.mxu0 0.0
    %2112 = vmatpush1.msra.mxu0 0.0
    %2113 = vmatprep.subr.mxu0 0.0
    %2114 = vmatpush1.msra.mxu0 0.0
    %2115 = vmatprep.subr.mxu0 0.0
    %2116 = vmatpush1.msra.mxu0 0.0
    %2117 = vmatprep.subr.mxu0 0.0
    %2118 = vmatpush1.msra.mxu0 0.0
    %2119 = vmatprep.subr.mxu0 0.0
    %2120 = vmatpush1.msra.mxu0 0.0
    %2121 = vmatprep.subr.mxu0 0.0
    %2122 = vmatpush1.msra.mxu0 0.0
    %2123 = vmatprep.mubr.f32.mxu0 0.0
    %2124 = vmatmul.mubr.f32.gmra.mrb[0].mxu0 %v2057
    %v2125 = vpop.f32.mrb[0].mxu0
    %v2126 = vadd.f32 %v2050, %v2125
    %v2127 = vpop.f32.mrb[0].mxu0
    %2128 = vdwg.mxu0
    %v2129 = vadd.f32 %v2126, %v490
    %v2130 = vtanh.pop %v2129
    %v2131 = vsel %vm494, %v2130, -inf
    %v2132 = vrot.slane %v2131, 4
    %v2133 = vmax.f32 %v2131, %v2132
    %v2134 = vrot.slane %v2133, 2
    %v2135 = vmax.f32 %v2133, %v2134
    %v2136 = vrot.slane %v2135, 1
    %v2137 = vmax.f32 %v2135, %v2136
    %v2138 = vsub.f32 %v2130, %v2137
    %v2139 = vmul.f32 %v2138, 1.442695
    %v2140 = vpow.pop %v2139
    %v2141 = vsel %vm494, %v2140, 0.0
    %v2142 = vrot.slane %v2141, 4
    %v2143 = vadd.f32 %v2141, %v2142
    %v2144 = vrot.slane %v2143, 2
    %v2145 = vadd.f32 %v2143, %v2144
    %v2146 = vrot.slane %v2145, 1
    %v2147 = vadd.f32 %v2145, %v2146
    %v2148 = vrcp.pop %v2147
    %v2149 = vmul.f32 %v2140, %v2148
    %v2152 = vunpack.c.l.s4 1966171168
    %v2153 = vunpack.c.0.s8 %v2152
    %v2154 = vlaneseq
    %v2155 = vshrl.u32 %v2154, 7
    %v2156 = vsub.s32 %v2153, %v2155
    %v2157 = vrot.slane %v2149, %v2156
    %v2158 = vcombine.high %v2157, %v2157
    %v2160 = vunpack.c.l.s4 1966171168
    %v2161 = vunpack.c.0.s8 %v2160
    %v2162 = vlaneseq
    %v2163 = vshrl.u32 %v2162, 7
    %v2164 = vsub.s32 %v2161, %v2163
    %v2165 = vrot.slane %v2157, %v2164
    %v2167 = vunpack.c.l.s4 1966171168
    %v2168 = vunpack.c.0.s8 %v2167
    %v2169 = vlaneseq
    %v2170 = vshrl.u32 %v2169, 7
    %v2171 = vsub.s32 %v2168, %v2170
    %v2172 = vrot.slane %v2158, %v2171
    %2175 = vst [vmem:[#allocation11 + $0x6] sm:$0x1] %v2165
    %2176 = vst [vmem:[#allocation11 + $0xe] sm:$0x1] %v2172
    %2177 = vmatprep.subr.mxu0 0.0
    %2178 = vmatpush1.msra.mxu0 %v213
    %2179 = vmatprep.subr.mxu0 0.0
    %2180 = vmatpush1.msra.mxu0 %v214
    %2181 = vmatprep.subr.mxu0 0.0
    %2182 = vmatpush1.msra.mxu0 %v215
    %2183 = vmatprep.subr.mxu0 0.0
    %2184 = vmatpush1.msra.mxu0 %v216
    %2185 = vmatprep.subr.mxu0 0.0
    %2186 = vmatpush1.msra.mxu0 %v217
    %2187 = vmatprep.subr.mxu0 0.0
    %2188 = vmatpush1.msra.mxu0 %v218
    %2189 = vmatprep.subr.mxu0 0.0
    %2190 = vmatpush1.msra.mxu0 %v219
    %2191 = vmatprep.subr.mxu0 0.0
    %2192 = vmatpush1.msra.mxu0 %v220
    %2193 = vmatprep.subr.mxu0 0.0
    %2194 = vmatpush1.msra.mxu0 %v221
    %2195 = vmatprep.subr.mxu0 0.0
    %2196 = vmatpush1.msra.mxu0 %v222
    %2197 = vmatprep.subr.mxu0 0.0
    %2198 = vmatpush1.msra.mxu0 %v223
    %2199 = vmatprep.subr.mxu0 0.0
    %2200 = vmatpush1.msra.mxu0 %v224
    %2201 = vmatprep.subr.mxu0 0.0
    %2202 = vmatpush1.msra.mxu0 %v225
    %2203 = vmatprep.subr.mxu0 0.0
    %2204 = vmatpush1.msra.mxu0 %v226
    %2205 = vmatprep.subr.mxu0 0.0
    %2206 = vmatpush1.msra.mxu0 %v227
    %2207 = vmatprep.subr.mxu0 0.0
    %2208 = vmatpush1.msra.mxu0 %v228
    %2209 = vmatprep.subr.mxu0 0.0
    %2210 = vmatpush1.msra.mxu0 0.0
    %2211 = vmatprep.subr.mxu0 0.0
    %2212 = vmatpush1.msra.mxu0 0.0
    %2213 = vmatprep.subr.mxu0 0.0
    %2214 = vmatpush1.msra.mxu0 0.0
    %2215 = vmatprep.subr.mxu0 0.0
    %2216 = vmatpush1.msra.mxu0 0.0
    %2217 = vmatprep.subr.mxu0 0.0
    %2218 = vmatpush1.msra.mxu0 0.0
    %2219 = vmatprep.subr.mxu0 0.0
    %2220 = vmatpush1.msra.mxu0 0.0
    %2221 = vmatprep.subr.mxu0 0.0
    %2222 = vmatpush1.msra.mxu0 0.0
    %2223 = vmatprep.subr.mxu0 0.0
    %2224 = vmatpush1.msra.mxu0 0.0
    %2225 = vmatprep.subr.mxu0 0.0
    %2226 = vmatpush1.msra.mxu0 0.0
    %2227 = vmatprep.subr.mxu0 0.0
    %2228 = vmatpush1.msra.mxu0 0.0
    %2229 = vmatprep.subr.mxu0 0.0
    %2230 = vmatpush1.msra.mxu0 0.0
    %2231 = vmatprep.subr.mxu0 0.0
    %2232 = vmatpush1.msra.mxu0 0.0
    %2233 = vmatprep.subr.mxu0 0.0
    %2234 = vmatpush1.msra.mxu0 0.0
    %2235 = vmatprep.subr.mxu0 0.0
    %2236 = vmatpush1.msra.mxu0 0.0
    %2237 = vmatprep.subr.mxu0 0.0
    %2238 = vmatpush1.msra.mxu0 0.0
    %2239 = vmatprep.subr.mxu0 0.0
    %2240 = vmatpush1.msra.mxu0 0.0
    %2241 = vmatprep.mubr.f32.mxu0 0.0
    %2242 = vmatmul.mubr.f32.gmra.mrb[0].mxu0 %v2057
    %v2243 = vpop.f32.mrb[0].mxu0
    %v2244 = vadd.f32 0.0, %v2243
    %v2245 = vpop.f32.mrb[0].mxu0
    %2246 = vdwg.mxu0
    %v2248 = vrot.slane %v2244, 1
    %v2249 = vrot.slane %v2244, 2
    %v2252 = vadd.f32 %v205, %v2248
    %v2253 = vadd.f32 %v210, %v2249
    %v2254 = vtanh.pop %v2252
    %v2255 = vtanh.pop %v2253
    %2256 = vmatprep.subr.mxu0 0.0
    %2257 = vmatpush1.msra.mxu0 %v245
    %2258 = vmatprep.subr.mxu0 0.0
    %2259 = vmatpush1.msra.mxu0 %v246
    %2260 = vmatprep.subr.mxu0 0.0
    %2261 = vmatpush1.msra.mxu0 %v247
    %2262 = vmatprep.subr.mxu0 0.0
    %2263 = vmatpush1.msra.mxu0 %v248
    %2264 = vmatprep.subr.mxu0 0.0
    %2265 = vmatpush1.msra.mxu0 %v249
    %2266 = vmatprep.subr.mxu0 0.0
    %2267 = vmatpush1.msra.mxu0 %v250
    %2268 = vmatprep.subr.mxu0 0.0
    %2269 = vmatpush1.msra.mxu0 %v251
    %2270 = vmatprep.subr.mxu0 0.0
    %2271 = vmatpush1.msra.mxu0 %v252
    %2272 = vmatprep.subr.mxu0 0.0
    %2273 = vmatpush1.msra.mxu0 %v253
    %2274 = vmatprep.subr.mxu0 0.0
    %2275 = vmatpush1.msra.mxu0 %v254
    %2276 = vmatprep.subr.mxu0 0.0
    %2277 = vmatpush1.msra.mxu0 %v255
    %2278 = vmatprep.subr.mxu0 0.0
    %2279 = vmatpush1.msra.mxu0 %v256
    %2280 = vmatprep.subr.mxu0 0.0
    %2281 = vmatpush1.msra.mxu0 %v257
    %2282 = vmatprep.subr.mxu0 0.0
    %2283 = vmatpush1.msra.mxu0 %v258
    %2284 = vmatprep.subr.mxu0 0.0
    %2285 = vmatpush1.msra.mxu0 %v259
    %2286 = vmatprep.subr.mxu0 0.0
    %2287 = vmatpush1.msra.mxu0 %v260
    %2288 = vmatprep.subr.mxu0 0.0
    %2289 = vmatpush1.msra.mxu0 0.0
    %2290 = vmatprep.subr.mxu0 0.0
    %2291 = vmatpush1.msra.mxu0 0.0
    %2292 = vmatprep.subr.mxu0 0.0
    %2293 = vmatpush1.msra.mxu0 0.0
    %2294 = vmatprep.subr.mxu0 0.0
    %2295 = vmatpush1.msra.mxu0 0.0
    %2296 = vmatprep.subr.mxu0 0.0
    %2297 = vmatpush1.msra.mxu0 0.0
    %2298 = vmatprep.subr.mxu0 0.0
    %2299 = vmatpush1.msra.mxu0 0.0
    %2300 = vmatprep.subr.mxu0 0.0
    %2301 = vmatpush1.msra.mxu0 0.0
    %2302 = vmatprep.subr.mxu0 0.0
    %2303 = vmatpush1.msra.mxu0 0.0
    %2304 = vmatprep.subr.mxu0 0.0
    %2305 = vmatpush1.msra.mxu0 0.0
    %2306 = vmatprep.subr.mxu0 0.0
    %2307 = vmatpush1.msra.mxu0 0.0
    %2308 = vmatprep.subr.mxu0 0.0
    %2309 = vmatpush1.msra.mxu0 0.0
    %2310 = vmatprep.subr.mxu0 0.0
    %2311 = vmatpush1.msra.mxu0 0.0
    %2312 = vmatprep.subr.mxu0 0.0
    %2313 = vmatpush1.msra.mxu0 0.0
    %2314 = vmatprep.subr.mxu0 0.0
    %2315 = vmatpush1.msra.mxu0 0.0
    %2316 = vmatprep.subr.mxu0 0.0
    %2317 = vmatpush1.msra.mxu0 0.0
    %2318 = vmatprep.subr.mxu0 0.0
    %2319 = vmatpush1.msra.mxu0 0.0
    %2320 = vmatprep.mubr.f32.mxu0 0.0
    %2321 = vmatmul.mubr.f32.gmra.mrb[0].mxu0 %v2130
    %v2322 = vpop.f32.mrb[0].mxu0
    %v2323 = vadd.f32 0.0, %v2322
    %v2324 = vpop.f32.mrb[0].mxu0
    %2325 = vdwg.mxu0
    %v2328 = vrot.slane %v2254, 7
    %v2329 = vrot.slane %v2255, 6
    %v2330 = vsel %vm413, %v2329, %v2328
    %2332 = vmatprep.subr.mxu0 0.0
    %2333 = vmatpush1.msra.mxu0 %v229
    %2334 = vmatprep.subr.mxu0 0.0
    %2335 = vmatpush1.msra.mxu0 %v230
    %2336 = vmatprep.subr.mxu0 0.0
    %2337 = vmatpush1.msra.mxu0 %v231
    %2338 = vmatprep.subr.mxu0 0.0
    %2339 = vmatpush1.msra.mxu0 %v232
    %2340 = vmatprep.subr.mxu0 0.0
    %2341 = vmatpush1.msra.mxu0 %v233
    %2342 = vmatprep.subr.mxu0 0.0
    %2343 = vmatpush1.msra.mxu0 %v234
    %2344 = vmatprep.subr.mxu0 0.0
    %2345 = vmatpush1.msra.mxu0 %v235
    %2346 = vmatprep.subr.mxu0 0.0
    %2347 = vmatpush1.msra.mxu0 %v236
    %2348 = vmatprep.subr.mxu0 0.0
    %2349 = vmatpush1.msra.mxu0 %v237
    %2350 = vmatprep.subr.mxu0 0.0
    %2351 = vmatpush1.msra.mxu0 %v238
    %2352 = vmatprep.subr.mxu0 0.0
    %2353 = vmatpush1.msra.mxu0 %v239
    %2354 = vmatprep.subr.mxu0 0.0
    %2355 = vmatpush1.msra.mxu0 %v240
    %2356 = vmatprep.subr.mxu0 0.0
    %2357 = vmatpush1.msra.mxu0 %v241
    %2358 = vmatprep.subr.mxu0 0.0
    %2359 = vmatpush1.msra.mxu0 %v242
    %2360 = vmatprep.subr.mxu0 0.0
    %2361 = vmatpush1.msra.mxu0 %v243
    %2362 = vmatprep.subr.mxu0 0.0
    %2363 = vmatpush1.msra.mxu0 %v244
    %2364 = vmatprep.subr.mxu0 0.0
    %2365 = vmatpush1.msra.mxu0 0.0
    %2366 = vmatprep.subr.mxu0 0.0
    %2367 = vmatpush1.msra.mxu0 0.0
    %2368 = vmatprep.subr.mxu0 0.0
    %2369 = vmatpush1.msra.mxu0 0.0
    %2370 = vmatprep.subr.mxu0 0.0
    %2371 = vmatpush1.msra.mxu0 0.0
    %2372 = vmatprep.subr.mxu0 0.0
    %2373 = vmatpush1.msra.mxu0 0.0
    %2374 = vmatprep.subr.mxu0 0.0
    %2375 = vmatpush1.msra.mxu0 0.0
    %2376 = vmatprep.subr.mxu0 0.0
    %2377 = vmatpush1.msra.mxu0 0.0
    %2378 = vmatprep.subr.mxu0 0.0
    %2379 = vmatpush1.msra.mxu0 0.0
    %2380 = vmatprep.subr.mxu0 0.0
    %2381 = vmatpush1.msra.mxu0 0.0
    %2382 = vmatprep.subr.mxu0 0.0
    %2383 = vmatpush1.msra.mxu0 0.0
    %2384 = vmatprep.subr.mxu0 0.0
    %2385 = vmatpush1.msra.mxu0 0.0
    %2386 = vmatprep.subr.mxu0 0.0
    %2387 = vmatpush1.msra.mxu0 0.0
    %2388 = vmatprep.subr.mxu0 0.0
    %2389 = vmatpush1.msra.mxu0 0.0
    %2390 = vmatprep.subr.mxu0 0.0
    %2391 = vmatpush1.msra.mxu0 0.0
    %2392 = vmatprep.subr.mxu0 0.0
    %2393 = vmatpush1.msra.mxu0 0.0
    %2394 = vmatprep.subr.mxu0 0.0
    %2395 = vmatpush1.msra.mxu0 0.0
    %2396 = vmatprep.mubr.f32.mxu0 0.0
    %2397 = vmatmul.mubr.f32.gmra.mrb[0].mxu0 %v2330
    %v2398 = vpop.f32.mrb[0].mxu0
    %v2399 = vadd.f32 %v2323, %v2398
    %v2400 = vpop.f32.mrb[0].mxu0
    %2401 = vdwg.mxu0
    %v2402 = vadd.f32 %v2399, %v490
    %v2403 = vtanh.pop %v2402
    %v2404 = vsel %vm494, %v2403, -inf
    %v2405 = vrot.slane %v2404, 4
    %v2406 = vmax.f32 %v2404, %v2405
    %v2407 = vrot.slane %v2406, 2
    %v2408 = vmax.f32 %v2406, %v2407
    %v2409 = vrot.slane %v2408, 1
    %v2410 = vmax.f32 %v2408, %v2409
    %v2411 = vsub.f32 %v2403, %v2410
    %v2412 = vmul.f32 %v2411, 1.442695
    %v2413 = vpow.pop %v2412
    %v2414 = vsel %vm494, %v2413, 0.0
    %v2415 = vrot.slane %v2414, 4
    %v2416 = vadd.f32 %v2414, %v2415
    %v2417 = vrot.slane %v2416, 2
    %v2418 = vadd.f32 %v2416, %v2417
    %v2419 = vrot.slane %v2418, 1
    %v2420 = vadd.f32 %v2418, %v2419
    %v2421 = vrcp.pop %v2420
    %v2422 = vmul.f32 %v2413, %v2421
    %v2425 = vunpack.c.l.s4 1966171168
    %v2426 = vunpack.c.0.s8 %v2425
    %v2427 = vlaneseq
    %v2428 = vshrl.u32 %v2427, 7
    %v2429 = vsub.s32 %v2426, %v2428
    %v2430 = vrot.slane %v2422, %v2429
    %v2431 = vcombine.high %v2430, %v2430
    %v2433 = vunpack.c.l.s4 1966171168
    %v2434 = vunpack.c.0.s8 %v2433
    %v2435 = vlaneseq
    %v2436 = vshrl.u32 %v2435, 7
    %v2437 = vsub.s32 %v2434, %v2436
    %v2438 = vrot.slane %v2430, %v2437
    %v2440 = vunpack.c.l.s4 1966171168
    %v2441 = vunpack.c.0.s8 %v2440
    %v2442 = vlaneseq
    %v2443 = vshrl.u32 %v2442, 7
    %v2444 = vsub.s32 %v2441, %v2443
    %v2445 = vrot.slane %v2431, %v2444
    %2448 = vst [vmem:[#allocation11 + $0x7] sm:$0x1] %v2438
    %2449 = vst [vmem:[#allocation11 + $0xf] sm:$0x1] %v2445
    // Predicated region
    $region50: #{tpu_custom_call.1} parent=1 // pred_check
      _
    $region51: #{tpu_custom_call.1} parent=1 // pred_check_branch
      %2451 = sbr.rel (0) target = $region53
    $region52: #{tpu_custom_call.1} parent=1 // pred_region
      %s2453 = ssub.s32 256, 256
      %2454 = vsyncadd [#allocation4], %s2453
      %s2455 = sshll.u32 [#allocation11], 4
      %s2456 = int_to_ptr.vmem [resolvable:$true] %s2455
      %2461 = dma.vmem_to_hbm [thread:$0]  %s2456, 256, %s7, [#allocation4], 128, 128, 8
    $region53: #{tpu_custom_call.1} parent=1 // pred_fallthru
      _
    // Predicated region
    $region54: #{tpu_custom_call.1} parent=1 // pred_check
      _
    $region55: #{tpu_custom_call.1} parent=1 // pred_check_branch
      %2463 = sbr.rel (0) target = $region57
    $region56: #{tpu_custom_call.1} parent=1 // pred_region
      %2464 = dma.done [#allocation4], 256
    $region57: #{tpu_custom_call.1} parent=1 // pred_fallthru
      _
    %2465 = vsyncpa [#allocation3], 1
    %2466 = vsyncpa [#allocation6], 1
    %2467 = vsyncpa [#allocation9], 1
    %2468 = vsyncpa [#allocation4], 1

</llo_original>
